<compile_context>
chip_gen: v6e
topology: v6e:2x2x1
jax: 0.10.0
libtpu: 0.0.40
codegen_flags: <defaults>
</compile_context>

<pallas_src>
import jax
import jax.numpy as jnp
from jax.experimental import pallas as pl
from jax.experimental.pallas import tpu as pltpu

LANE = 128
SUBLANE = 8
N_LAYERS = 3

NODE_TYPES = ("protein", "go_term")
EDGE_TYPES = (("protein", "annotated", "go_term"),
              ("go_term", "rev_annotated", "protein"))


def _round_up(x, m):
    return (x + m - 1) // m * m


# ------------------------------ fused kernel --------------------------------

def _fused_forward_kernel(a_pg_ref, a_gp_ref, x_p_ref, x_g_ref,
                          wl_ref, wr_ref, b_ref, linw_ref, linb_ref,
                          out_p_ref, out_g_ref):
    """Whole HeteroGraphSAGE forward in VMEM.

    a_pg_ref : [Ng, Np] bf16  row-normalized adjacency, dst=go_term, src=protein
    a_gp_ref : [Np, Ng] bf16  row-normalized adjacency, dst=protein, src=go_term
    x_p_ref  : [Np, 128] f32  padded protein features
    x_g_ref  : [Ng, 128] f32  padded go_term features
    wl_ref   : [6, 128, 128] bf16  lin_l per (layer, edge type)  idx = 2*layer + et
    wr_ref   : [6, 128, 128] bf16  lin_r per (layer, edge type)
    b_ref    : [8, 128] f32   rows 0..5 = conv biases (same indexing), rows 6..7 = 0
    linw_ref : [128, 128] bf16  final Linear weight (zero-padded)
    linb_ref : [1, 128] f32     final Linear bias   (zero-padded)
    out_*    : [N, 128] f32     lane-dense outputs (sliced on host)
    """
    f32 = jnp.float32
    bf16 = jnp.bfloat16

    a_pg = a_pg_ref[...]
    a_gp = a_gp_ref[...]

    h_p = x_p_ref[...]
    h_g = x_g_ref[...]

    for li in range(N_LAYERS):
        i_pg = 2 * li       # edge type 0: protein -> go_term (dst = go_term)
        i_gp = 2 * li + 1   # edge type 1: go_term -> protein (dst = protein)

        hp_b = h_p.astype(bf16)
        hg_b = h_g.astype(bf16)

        # lin_l (neighbor) path: project source features first so the O(Nd*Ns)
        # aggregation matmul always has inner dim == dim_h.
        msg_p = jnp.dot(hp_b, wl_ref[i_pg], preferred_element_type=f32)  # [Np, H]
        msg_g = jnp.dot(hg_b, wl_ref[i_gp], preferred_element_type=f32)  # [Ng, H]

        new_g = (jnp.dot(a_pg, msg_p.astype(bf16), preferred_element_type=f32)
                 + jnp.dot(hg_b, wr_ref[i_pg], preferred_element_type=f32)
                 + b_ref[i_pg:i_pg + 1, :])
        new_p = (jnp.dot(a_gp, msg_g.astype(bf16), preferred_element_type=f32)
                 + jnp.dot(hp_b, wr_ref[i_gp], preferred_element_type=f32)
                 + b_ref[i_gp:i_gp + 1, :])

        if li < N_LAYERS - 1:            # ReLU after conv1 / conv2 only
            new_p = jnp.maximum(new_p, 0.0)
            new_g = jnp.maximum(new_g, 0.0)

        h_p, h_g = new_p, new_g

    linw = linw_ref[...]
    linb = linb_ref[...]
    out_p_ref[...] = jnp.dot(h_p.astype(bf16), linw, preferred_element_type=f32) + linb
    out_g_ref[...] = jnp.dot(h_g.astype(bf16), linw, preferred_element_type=f32) + linb


def _full_spec(shape):
    # whole-array block (satisfies the (8,128) rule because block == array dims)
    return pl.BlockSpec(shape, lambda i: (0,) * len(shape))


def fused_hetero_sage_forward(a_pg, a_gp, x_p, x_g, wl, wr, b, lin_w, lin_b):
    np_pad = x_p.shape[0]
    ng_pad = x_g.shape[0]
    H = wl.shape[-1]
    O = lin_w.shape[-1]

    inputs = (a_pg, a_gp, x_p, x_g, wl, wr, b, lin_w, lin_b)

    # advisory cost estimate for XLA's scheduler
    flops_layer = (2 * (np_pad + ng_pad) * H * H          # lin_l projections
                   + 2 * 2 * np_pad * ng_pad * H          # both aggregations
                   + 2 * (np_pad + ng_pad) * H * H)       # lin_r projections
    flops = N_LAYERS * flops_layer + 2 * (np_pad + ng_pad) * H * O
    in_bytes = sum(int(a.size) * a.dtype.itemsize for a in inputs)
    out_bytes = (np_pad + ng_pad) * O * 4
    cost = pl.CostEstimate(flops=flops, transcendentals=0,
                           bytes_accessed=in_bytes + out_bytes)

    out_p, out_g = pl.pallas_call(
        _fused_forward_kernel,
        grid=(1,),
        out_shape=(jax.ShapeDtypeStruct((np_pad, O), jnp.float32),
                   jax.ShapeDtypeStruct((ng_pad, O), jnp.float32)),
        in_specs=[_full_spec(a.shape) for a in inputs],
        out_specs=(_full_spec((np_pad, O)), _full_spec((ng_pad, O))),
        compiler_params=pltpu.CompilerParams(
            dimension_semantics=("arbitrary",),
            vmem_limit_bytes=32 * 1024 * 1024),
        cost_estimate=cost,
    )(*inputs)
    return out_p, out_g


# --------------------------- host-side construction -------------------------

def _glorot(key, shape):
    fan_in, fan_out = shape
    lim = (6.0 / (fan_in + fan_out)) ** 0.5
    return jax.random.uniform(key, shape, jnp.float32, -lim, lim)


def _pad2(w, rows, cols):
    out = jnp.zeros((rows, cols), jnp.float32)
    return out.at[:w.shape[0], :w.shape[1]].set(w)


def make_params(key, f_protein, f_go, dim_h, dim_out, h_pad, o_pad):
    """Stacked, zero-padded, bf16 weights for the fused kernel."""
    feat = {"protein": f_protein, "go_term": f_go}
    wl_list, wr_list, b_rows = [], [], []
    for li in range(N_LAYERS):
        for (src, _, dst) in EDGE_TYPES:
            f_src = feat[src] if li == 0 else dim_h
            f_dst = feat[dst] if li == 0 else dim_h
            key, k1, k2 = jax.random.split(key, 3)
            wl_list.append(_pad2(_glorot(k1, (f_src, dim_h)), h_pad, h_pad))
            wr_list.append(_pad2(_glorot(k2, (f_dst, dim_h)), h_pad, h_pad))
            b_rows.append(jnp.zeros((h_pad,), jnp.float32))
    while len(b_rows) < SUBLANE:                       # pad bias table to 8 rows
        b_rows.append(jnp.zeros((h_pad,), jnp.float32))

    WL = jnp.stack(wl_list).astype(jnp.bfloat16)       # [6, 128, 128]
    WR = jnp.stack(wr_list).astype(jnp.bfloat16)       # [6, 128, 128]
    B = jnp.stack(b_rows)                              # [8, 128] f32

    key, k = jax.random.split(key)
    lin_w = _pad2(_glorot(k, (dim_h, dim_out)), h_pad, o_pad).astype(jnp.bfloat16)
    lin_b = jnp.zeros((1, o_pad), jnp.float32)
    return WL, WR, B, lin_w, lin_b


def dense_mean_adj(src_idx, dst_idx, n_src_pad, n_dst_pad):
    """Row-normalized dense adjacency A[dst, src] in bf16; rows with no edges
    stay 0 (matches PyG scatter-mean for isolated nodes); padded rows/cols = 0."""
    A = jnp.zeros((n_dst_pad, n_src_pad), jnp.float32).at[dst_idx, src_idx].add(1.0)
    deg = A.sum(axis=1, keepdims=True)
    return (A / jnp.maximum(deg, 1.0)).astype(jnp.bfloat16)


def _pad_feat(x, n_pad, f_pad):
    out = jnp.zeros((n_pad, f_pad), jnp.float32)
    return out.at[:x.shape[0], :x.shape[1]].set(x)


# ---------------------------------- main ------------------------------------

if __name__ == "__main__":
    key = jax.random.PRNGKey(0)

    # small deterministic hetero graph
    n_protein, n_go = 24, 40
    f_protein, f_go = 16, 12
    dim_h, dim_out = 32, 8
    n_edges = 96

    np_pad = _round_up(n_protein, SUBLANE)
    ng_pad = _round_up(n_go, SUBLANE)
    h_pad = _round_up(dim_h, LANE)      # 128
    o_pad = _round_up(dim_out, LANE)    # 128
    f_pad = _round_up(max(f_protein, f_go, dim_h), LANE)   # 128

    key, kx_p, kx_g, ke_p, ke_g = jax.random.split(key, 5)
    x_p = jax.random.normal(kx_p, (n_protein, f_protein), jnp.float32)
    x_g = jax.random.normal(kx_g, (n_go, f_go), jnp.float32)
    e_p = jax.random.randint(ke_p, (n_edges,), 0, n_protein)   # protein ids
    e_g = jax.random.randint(ke_g, (n_edges,), 0, n_go)        # go_term ids

    # dense mean-aggregation adjacencies (both directions), bf16
    a_pg = dense_mean_adj(e_p, e_g, np_pad, ng_pad)   # dst=go_term  [Ng, Np]
    a_gp = dense_mean_adj(e_g, e_p, ng_pad, np_pad)   # dst=protein  [Np, Ng]

    key, kp = jax.random.split(key)
    WL, WR, B, lin_w, lin_b = make_params(kp, f_protein, f_go, dim_h, dim_out,
                                          h_pad, o_pad)

    xp_pad = _pad_feat(x_p, np_pad, f_pad)
    xg_pad = _pad_feat(x_g, ng_pad, f_pad)

    out_p_pad, out_g_pad = fused_hetero_sage_forward(
        a_pg, a_gp, xp_pad, xg_pad, WL, WR, B, lin_w, lin_b)

    out = {
        "protein": out_p_pad[:n_protein, :dim_out],
        "go_term": out_g_pad[:n_go, :dim_out],
    }
    out = jax.tree_util.tree_map(jax.block_until_ready, out)

    assert out["protein"].shape == (n_protein, dim_out)
    assert out["go_term"].shape == (n_go, dim_out)
    assert bool(jnp.all(jnp.isfinite(out["protein"])))
    assert bool(jnp.all(jnp.isfinite(out["go_term"])))
    print("KERNEL_OK")
</pallas_src>

<mosaic_0001>
module attributes {stable_mosaic.version = 11 : i64} {
  func.func @_fused_forward_kernel(%arg0: i32, %arg1: memref<40x24xbf16, #tpu.memory_space<vmem>>, %arg2: memref<24x40xbf16, #tpu.memory_space<vmem>>, %arg3: memref<24x128xf32, #tpu.memory_space<vmem>>, %arg4: memref<40x128xf32, #tpu.memory_space<vmem>>, %arg5: memref<6x128x128xbf16, #tpu.memory_space<vmem>>, %arg6: memref<6x128x128xbf16, #tpu.memory_space<vmem>>, %arg7: memref<8x128xf32, #tpu.memory_space<vmem>>, %arg8: memref<128x128xbf16, #tpu.memory_space<vmem>>, %arg9: memref<1x128xf32, #tpu.memory_space<vmem>>, %arg10: memref<24x128xf32, #tpu.memory_space<vmem>>, %arg11: memref<40x128xf32, #tpu.memory_space<vmem>>) attributes {dimension_semantics = [#tpu.dimension_semantics<arbitrary>], iteration_bounds = array<i64: 1>, scalar_prefetch = 0 : i64, scratch_operands = 0 : i64, tpu.core_type = #tpu.core_type<tc>, window_params = [{pipeline_mode = #tpu.pipeline_mode<synchronous>, transform_indices = @transform_0, window_bounds = array<i64: 40, 24>}, {pipeline_mode = #tpu.pipeline_mode<synchronous>, transform_indices = @transform_1, window_bounds = array<i64: 24, 40>}, {pipeline_mode = #tpu.pipeline_mode<synchronous>, transform_indices = @transform_2, window_bounds = array<i64: 24, 128>}, {pipeline_mode = #tpu.pipeline_mode<synchronous>, transform_indices = @transform_3, window_bounds = array<i64: 40, 128>}, {pipeline_mode = #tpu.pipeline_mode<synchronous>, transform_indices = @transform_4, window_bounds = array<i64: 6, 128, 128>}, {pipeline_mode = #tpu.pipeline_mode<synchronous>, transform_indices = @transform_5, window_bounds = array<i64: 6, 128, 128>}, {pipeline_mode = #tpu.pipeline_mode<synchronous>, transform_indices = @transform_6, window_bounds = array<i64: 8, 128>}, {pipeline_mode = #tpu.pipeline_mode<synchronous>, transform_indices = @transform_7, window_bounds = array<i64: 128, 128>}, {pipeline_mode = #tpu.pipeline_mode<synchronous>, transform_indices = @transform_8, window_bounds = array<i64: 1, 128>}, {pipeline_mode = #tpu.pipeline_mode<synchronous>, transform_indices = @transform_9, window_bounds = array<i64: 24, 128>}, {pipeline_mode = #tpu.pipeline_mode<synchronous>, transform_indices = @transform_10, window_bounds = array<i64: 40, 128>}]} {
    %c0 = arith.constant 0 : index
    %c0_0 = arith.constant 0 : index
    %0 = vector.load %arg1[%c0, %c0_0] : memref<40x24xbf16, #tpu.memory_space<vmem>>, vector<40x24xbf16>
    %c0_1 = arith.constant 0 : index
    %c0_2 = arith.constant 0 : index
    %1 = vector.load %arg2[%c0_1, %c0_2] : memref<24x40xbf16, #tpu.memory_space<vmem>>, vector<24x40xbf16>
    %c0_3 = arith.constant 0 : index
    %c0_4 = arith.constant 0 : index
    %2 = vector.load %arg3[%c0_3, %c0_4] : memref<24x128xf32, #tpu.memory_space<vmem>>, vector<24x128xf32>
    %c0_5 = arith.constant 0 : index
    %c0_6 = arith.constant 0 : index
    %3 = vector.load %arg4[%c0_5, %c0_6] : memref<40x128xf32, #tpu.memory_space<vmem>>, vector<40x128xf32>
    %4 = arith.truncf %2 : vector<24x128xf32> to vector<24x128xbf16>
    %5 = arith.truncf %3 : vector<40x128xf32> to vector<40x128xbf16>
    %c0_7 = arith.constant 0 : index
    %c0_8 = arith.constant 0 : index
    %c0_9 = arith.constant 0 : index
    %6 = vector.load %arg5[%c0_7, %c0_8, %c0_9] : memref<6x128x128xbf16, #tpu.memory_space<vmem>>, vector<1x128x128xbf16>
    %7 = vector.shape_cast %6 : vector<1x128x128xbf16> to vector<128x128xbf16>
    %cst = arith.constant dense<0.000000e+00> : vector<24x128xf32>
    %8 = tpu.matmul %4, %7, %cst {dimension_numbers = #tpu.dot_dimension_numbers<[1], [0], [0], [1], [0, 0, 1, 1], [], []>} : vector<24x128xbf16>, vector<128x128xbf16>, vector<24x128xf32> -> vector<24x128xf32>
    %c1 = arith.constant 1 : index
    %c0_10 = arith.constant 0 : index
    %c0_11 = arith.constant 0 : index
    %9 = vector.load %arg5[%c1, %c0_10, %c0_11] : memref<6x128x128xbf16, #tpu.memory_space<vmem>>, vector<1x128x128xbf16>
    %10 = vector.shape_cast %9 : vector<1x128x128xbf16> to vector<128x128xbf16>
    %cst_12 = arith.constant dense<0.000000e+00> : vector<40x128xf32>
    %11 = tpu.matmul %5, %10, %cst_12 {dimension_numbers = #tpu.dot_dimension_numbers<[1], [0], [0], [1], [0, 0, 1, 1], [], []>} : vector<40x128xbf16>, vector<128x128xbf16>, vector<40x128xf32> -> vector<40x128xf32>
    %12 = arith.truncf %8 : vector<24x128xf32> to vector<24x128xbf16>
    %cst_13 = arith.constant dense<0.000000e+00> : vector<40x128xf32>
    %13 = tpu.matmul %0, %12, %cst_13 {dimension_numbers = #tpu.dot_dimension_numbers<[1], [0], [0], [1], [0, 0, 1, 1], [], []>} : vector<40x24xbf16>, vector<24x128xbf16>, vector<40x128xf32> -> vector<40x128xf32>
    %c0_14 = arith.constant 0 : index
    %c0_15 = arith.constant 0 : index
    %c0_16 = arith.constant 0 : index
    %14 = vector.load %arg6[%c0_14, %c0_15, %c0_16] : memref<6x128x128xbf16, #tpu.memory_space<vmem>>, vector<1x128x128xbf16>
    %15 = vector.shape_cast %14 : vector<1x128x128xbf16> to vector<128x128xbf16>
    %cst_17 = arith.constant dense<0.000000e+00> : vector<40x128xf32>
    %16 = tpu.matmul %5, %15, %cst_17 {dimension_numbers = #tpu.dot_dimension_numbers<[1], [0], [0], [1], [0, 0, 1, 1], [], []>} : vector<40x128xbf16>, vector<128x128xbf16>, vector<40x128xf32> -> vector<40x128xf32>
    %17 = arith.addf %13, %16 : vector<40x128xf32>
    %c0_18 = arith.constant 0 : index
    %c0_19 = arith.constant 0 : index
    %18 = vector.load %arg7[%c0_18, %c0_19] : memref<8x128xf32, #tpu.memory_space<vmem>>, vector<1x128xf32>
    %19 = vector.broadcast %18 : vector<1x128xf32> to vector<40x128xf32>
    %20 = arith.addf %17, %19 : vector<40x128xf32>
    %21 = arith.truncf %11 : vector<40x128xf32> to vector<40x128xbf16>
    %cst_20 = arith.constant dense<0.000000e+00> : vector<24x128xf32>
    %22 = tpu.matmul %1, %21, %cst_20 {dimension_numbers = #tpu.dot_dimension_numbers<[1], [0], [0], [1], [0, 0, 1, 1], [], []>} : vector<24x40xbf16>, vector<40x128xbf16>, vector<24x128xf32> -> vector<24x128xf32>
    %c1_21 = arith.constant 1 : index
    %c0_22 = arith.constant 0 : index
    %c0_23 = arith.constant 0 : index
    %23 = vector.load %arg6[%c1_21, %c0_22, %c0_23] : memref<6x128x128xbf16, #tpu.memory_space<vmem>>, vector<1x128x128xbf16>
    %24 = vector.shape_cast %23 : vector<1x128x128xbf16> to vector<128x128xbf16>
    %cst_24 = arith.constant dense<0.000000e+00> : vector<24x128xf32>
    %25 = tpu.matmul %4, %24, %cst_24 {dimension_numbers = #tpu.dot_dimension_numbers<[1], [0], [0], [1], [0, 0, 1, 1], [], []>} : vector<24x128xbf16>, vector<128x128xbf16>, vector<24x128xf32> -> vector<24x128xf32>
    %26 = arith.addf %22, %25 : vector<24x128xf32>
    %c1_25 = arith.constant 1 : index
    %c0_26 = arith.constant 0 : index
    %27 = vector.load %arg7[%c1_25, %c0_26] : memref<8x128xf32, #tpu.memory_space<vmem>>, vector<1x128xf32>
    %28 = vector.broadcast %27 : vector<1x128xf32> to vector<24x128xf32>
    %29 = arith.addf %26, %28 : vector<24x128xf32>
    %cst_27 = arith.constant 0.000000e+00 : f32
    %30 = vector.broadcast %cst_27 : f32 to vector<24x128xf32>
    %31 = arith.maximumf %29, %30 : vector<24x128xf32>
    %cst_28 = arith.constant 0.000000e+00 : f32
    %32 = vector.broadcast %cst_28 : f32 to vector<40x128xf32>
    %33 = arith.maximumf %20, %32 : vector<40x128xf32>
    %34 = arith.truncf %31 : vector<24x128xf32> to vector<24x128xbf16>
    %35 = arith.truncf %33 : vector<40x128xf32> to vector<40x128xbf16>
    %c2 = arith.constant 2 : index
    %c0_29 = arith.constant 0 : index
    %c0_30 = arith.constant 0 : index
    %36 = vector.load %arg5[%c2, %c0_29, %c0_30] : memref<6x128x128xbf16, #tpu.memory_space<vmem>>, vector<1x128x128xbf16>
    %37 = vector.shape_cast %36 : vector<1x128x128xbf16> to vector<128x128xbf16>
    %cst_31 = arith.constant dense<0.000000e+00> : vector<24x128xf32>
    %38 = tpu.matmul %34, %37, %cst_31 {dimension_numbers = #tpu.dot_dimension_numbers<[1], [0], [0], [1], [0, 0, 1, 1], [], []>} : vector<24x128xbf16>, vector<128x128xbf16>, vector<24x128xf32> -> vector<24x128xf32>
    %c3 = arith.constant 3 : index
    %c0_32 = arith.constant 0 : index
    %c0_33 = arith.constant 0 : index
    %39 = vector.load %arg5[%c3, %c0_32, %c0_33] : memref<6x128x128xbf16, #tpu.memory_space<vmem>>, vector<1x128x128xbf16>
    %40 = vector.shape_cast %39 : vector<1x128x128xbf16> to vector<128x128xbf16>
    %cst_34 = arith.constant dense<0.000000e+00> : vector<40x128xf32>
    %41 = tpu.matmul %35, %40, %cst_34 {dimension_numbers = #tpu.dot_dimension_numbers<[1], [0], [0], [1], [0, 0, 1, 1], [], []>} : vector<40x128xbf16>, vector<128x128xbf16>, vector<40x128xf32> -> vector<40x128xf32>
    %42 = arith.truncf %38 : vector<24x128xf32> to vector<24x128xbf16>
    %cst_35 = arith.constant dense<0.000000e+00> : vector<40x128xf32>
    %43 = tpu.matmul %0, %42, %cst_35 {dimension_numbers = #tpu.dot_dimension_numbers<[1], [0], [0], [1], [0, 0, 1, 1], [], []>} : vector<40x24xbf16>, vector<24x128xbf16>, vector<40x128xf32> -> vector<40x128xf32>
    %c2_36 = arith.constant 2 : index
    %c0_37 = arith.constant 0 : index
    %c0_38 = arith.constant 0 : index
    %44 = vector.load %arg6[%c2_36, %c0_37, %c0_38] : memref<6x128x128xbf16, #tpu.memory_space<vmem>>, vector<1x128x128xbf16>
    %45 = vector.shape_cast %44 : vector<1x128x128xbf16> to vector<128x128xbf16>
    %cst_39 = arith.constant dense<0.000000e+00> : vector<40x128xf32>
    %46 = tpu.matmul %35, %45, %cst_39 {dimension_numbers = #tpu.dot_dimension_numbers<[1], [0], [0], [1], [0, 0, 1, 1], [], []>} : vector<40x128xbf16>, vector<128x128xbf16>, vector<40x128xf32> -> vector<40x128xf32>
    %47 = arith.addf %43, %46 : vector<40x128xf32>
    %c2_40 = arith.constant 2 : index
    %c0_41 = arith.constant 0 : index
    %48 = vector.load %arg7[%c2_40, %c0_41] : memref<8x128xf32, #tpu.memory_space<vmem>>, vector<1x128xf32>
    %49 = vector.broadcast %48 : vector<1x128xf32> to vector<40x128xf32>
    %50 = arith.addf %47, %49 : vector<40x128xf32>
    %51 = arith.truncf %41 : vector<40x128xf32> to vector<40x128xbf16>
    %cst_42 = arith.constant dense<0.000000e+00> : vector<24x128xf32>
    %52 = tpu.matmul %1, %51, %cst_42 {dimension_numbers = #tpu.dot_dimension_numbers<[1], [0], [0], [1], [0, 0, 1, 1], [], []>} : vector<24x40xbf16>, vector<40x128xbf16>, vector<24x128xf32> -> vector<24x128xf32>
    %c3_43 = arith.constant 3 : index
    %c0_44 = arith.constant 0 : index
    %c0_45 = arith.constant 0 : index
    %53 = vector.load %arg6[%c3_43, %c0_44, %c0_45] : memref<6x128x128xbf16, #tpu.memory_space<vmem>>, vector<1x128x128xbf16>
    %54 = vector.shape_cast %53 : vector<1x128x128xbf16> to vector<128x128xbf16>
    %cst_46 = arith.constant dense<0.000000e+00> : vector<24x128xf32>
    %55 = tpu.matmul %34, %54, %cst_46 {dimension_numbers = #tpu.dot_dimension_numbers<[1], [0], [0], [1], [0, 0, 1, 1], [], []>} : vector<24x128xbf16>, vector<128x128xbf16>, vector<24x128xf32> -> vector<24x128xf32>
    %56 = arith.addf %52, %55 : vector<24x128xf32>
    %c3_47 = arith.constant 3 : index
    %c0_48 = arith.constant 0 : index
    %57 = vector.load %arg7[%c3_47, %c0_48] : memref<8x128xf32, #tpu.memory_space<vmem>>, vector<1x128xf32>
    %58 = vector.broadcast %57 : vector<1x128xf32> to vector<24x128xf32>
    %59 = arith.addf %56, %58 : vector<24x128xf32>
    %cst_49 = arith.constant 0.000000e+00 : f32
    %60 = vector.broadcast %cst_49 : f32 to vector<24x128xf32>
    %61 = arith.maximumf %59, %60 : vector<24x128xf32>
    %cst_50 = arith.constant 0.000000e+00 : f32
    %62 = vector.broadcast %cst_50 : f32 to vector<40x128xf32>
    %63 = arith.maximumf %50, %62 : vector<40x128xf32>
    %64 = arith.truncf %61 : vector<24x128xf32> to vector<24x128xbf16>
    %65 = arith.truncf %63 : vector<40x128xf32> to vector<40x128xbf16>
    %c4 = arith.constant 4 : index
    %c0_51 = arith.constant 0 : index
    %c0_52 = arith.constant 0 : index
    %66 = vector.load %arg5[%c4, %c0_51, %c0_52] : memref<6x128x128xbf16, #tpu.memory_space<vmem>>, vector<1x128x128xbf16>
    %67 = vector.shape_cast %66 : vector<1x128x128xbf16> to vector<128x128xbf16>
    %cst_53 = arith.constant dense<0.000000e+00> : vector<24x128xf32>
    %68 = tpu.matmul %64, %67, %cst_53 {dimension_numbers = #tpu.dot_dimension_numbers<[1], [0], [0], [1], [0, 0, 1, 1], [], []>} : vector<24x128xbf16>, vector<128x128xbf16>, vector<24x128xf32> -> vector<24x128xf32>
    %c5 = arith.constant 5 : index
    %c0_54 = arith.constant 0 : index
    %c0_55 = arith.constant 0 : index
    %69 = vector.load %arg5[%c5, %c0_54, %c0_55] : memref<6x128x128xbf16, #tpu.memory_space<vmem>>, vector<1x128x128xbf16>
    %70 = vector.shape_cast %69 : vector<1x128x128xbf16> to vector<128x128xbf16>
    %cst_56 = arith.constant dense<0.000000e+00> : vector<40x128xf32>
    %71 = tpu.matmul %65, %70, %cst_56 {dimension_numbers = #tpu.dot_dimension_numbers<[1], [0], [0], [1], [0, 0, 1, 1], [], []>} : vector<40x128xbf16>, vector<128x128xbf16>, vector<40x128xf32> -> vector<40x128xf32>
    %72 = arith.truncf %68 : vector<24x128xf32> to vector<24x128xbf16>
    %cst_57 = arith.constant dense<0.000000e+00> : vector<40x128xf32>
    %73 = tpu.matmul %0, %72, %cst_57 {dimension_numbers = #tpu.dot_dimension_numbers<[1], [0], [0], [1], [0, 0, 1, 1], [], []>} : vector<40x24xbf16>, vector<24x128xbf16>, vector<40x128xf32> -> vector<40x128xf32>
    %c4_58 = arith.constant 4 : index
    %c0_59 = arith.constant 0 : index
    %c0_60 = arith.constant 0 : index
    %74 = vector.load %arg6[%c4_58, %c0_59, %c0_60] : memref<6x128x128xbf16, #tpu.memory_space<vmem>>, vector<1x128x128xbf16>
    %75 = vector.shape_cast %74 : vector<1x128x128xbf16> to vector<128x128xbf16>
    %cst_61 = arith.constant dense<0.000000e+00> : vector<40x128xf32>
    %76 = tpu.matmul %65, %75, %cst_61 {dimension_numbers = #tpu.dot_dimension_numbers<[1], [0], [0], [1], [0, 0, 1, 1], [], []>} : vector<40x128xbf16>, vector<128x128xbf16>, vector<40x128xf32> -> vector<40x128xf32>
    %77 = arith.addf %73, %76 : vector<40x128xf32>
    %c4_62 = arith.constant 4 : index
    %c0_63 = arith.constant 0 : index
    %78 = vector.load %arg7[%c4_62, %c0_63] : memref<8x128xf32, #tpu.memory_space<vmem>>, vector<1x128xf32>
    %79 = vector.broadcast %78 : vector<1x128xf32> to vector<40x128xf32>
    %80 = arith.addf %77, %79 : vector<40x128xf32>
    %81 = arith.truncf %71 : vector<40x128xf32> to vector<40x128xbf16>
    %cst_64 = arith.constant dense<0.000000e+00> : vector<24x128xf32>
    %82 = tpu.matmul %1, %81, %cst_64 {dimension_numbers = #tpu.dot_dimension_numbers<[1], [0], [0], [1], [0, 0, 1, 1], [], []>} : vector<24x40xbf16>, vector<40x128xbf16>, vector<24x128xf32> -> vector<24x128xf32>
    %c5_65 = arith.constant 5 : index
    %c0_66 = arith.constant 0 : index
    %c0_67 = arith.constant 0 : index
    %83 = vector.load %arg6[%c5_65, %c0_66, %c0_67] : memref<6x128x128xbf16, #tpu.memory_space<vmem>>, vector<1x128x128xbf16>
    %84 = vector.shape_cast %83 : vector<1x128x128xbf16> to vector<128x128xbf16>
    %cst_68 = arith.constant dense<0.000000e+00> : vector<24x128xf32>
    %85 = tpu.matmul %64, %84, %cst_68 {dimension_numbers = #tpu.dot_dimension_numbers<[1], [0], [0], [1], [0, 0, 1, 1], [], []>} : vector<24x128xbf16>, vector<128x128xbf16>, vector<24x128xf32> -> vector<24x128xf32>
    %86 = arith.addf %82, %85 : vector<24x128xf32>
    %c5_69 = arith.constant 5 : index
    %c0_70 = arith.constant 0 : index
    %87 = vector.load %arg7[%c5_69, %c0_70] : memref<8x128xf32, #tpu.memory_space<vmem>>, vector<1x128xf32>
    %88 = vector.broadcast %87 : vector<1x128xf32> to vector<24x128xf32>
    %89 = arith.addf %86, %88 : vector<24x128xf32>
    %c0_71 = arith.constant 0 : index
    %c0_72 = arith.constant 0 : index
    %90 = vector.load %arg8[%c0_71, %c0_72] : memref<128x128xbf16, #tpu.memory_space<vmem>>, vector<128x128xbf16>
    %c0_73 = arith.constant 0 : index
    %c0_74 = arith.constant 0 : index
    %91 = vector.load %arg9[%c0_73, %c0_74] : memref<1x128xf32, #tpu.memory_space<vmem>>, vector<1x128xf32>
    %92 = arith.truncf %89 : vector<24x128xf32> to vector<24x128xbf16>
    %cst_75 = arith.constant dense<0.000000e+00> : vector<24x128xf32>
    %93 = tpu.matmul %92, %90, %cst_75 {dimension_numbers = #tpu.dot_dimension_numbers<[1], [0], [0], [1], [0, 0, 1, 1], [], []>} : vector<24x128xbf16>, vector<128x128xbf16>, vector<24x128xf32> -> vector<24x128xf32>
    %94 = vector.broadcast %91 : vector<1x128xf32> to vector<24x128xf32>
    %95 = arith.addf %93, %94 : vector<24x128xf32>
    %c0_76 = arith.constant 0 : index
    %c0_77 = arith.constant 0 : index
    %96 = vector.load %arg10[%c0_76, %c0_77] : memref<24x128xf32, #tpu.memory_space<vmem>>, vector<24x128xf32>
    tpu.vector_store %arg10[%c0_76, %c0_77], %95 {strides = array<i32>} : memref<24x128xf32, #tpu.memory_space<vmem>>, vector<24x128xf32>,
    %97 = arith.truncf %80 : vector<40x128xf32> to vector<40x128xbf16>
    %cst_78 = arith.constant dense<0.000000e+00> : vector<40x128xf32>
    %98 = tpu.matmul %97, %90, %cst_78 {dimension_numbers = #tpu.dot_dimension_numbers<[1], [0], [0], [1], [0, 0, 1, 1], [], []>} : vector<40x128xbf16>, vector<128x128xbf16>, vector<40x128xf32> -> vector<40x128xf32>
    %99 = vector.broadcast %91 : vector<1x128xf32> to vector<40x128xf32>
    %100 = arith.addf %98, %99 : vector<40x128xf32>
    %c0_79 = arith.constant 0 : index
    %c0_80 = arith.constant 0 : index
    %101 = vector.load %arg11[%c0_79, %c0_80] : memref<40x128xf32, #tpu.memory_space<vmem>>, vector<40x128xf32>
    tpu.vector_store %arg11[%c0_79, %c0_80], %100 {strides = array<i32>} : memref<40x128xf32, #tpu.memory_space<vmem>>, vector<40x128xf32>,
    return
  }
  func.func @transform_0(%arg0: i32) -> (i32, i32) {
    %c0_i32 = arith.constant 0 : i32
    %c0_i32_0 = arith.constant 0 : i32
    %c0_i32_1 = arith.constant 0 : i32
    return %c0_i32, %c0_i32_0 : i32, i32
  }
  func.func @transform_1(%arg0: i32) -> (i32, i32) {
    %c0_i32 = arith.constant 0 : i32
    %c0_i32_0 = arith.constant 0 : i32
    %c0_i32_1 = arith.constant 0 : i32
    return %c0_i32, %c0_i32_0 : i32, i32
  }
  func.func @transform_2(%arg0: i32) -> (i32, i32) {
    %c0_i32 = arith.constant 0 : i32
    %c0_i32_0 = arith.constant 0 : i32
    %c0_i32_1 = arith.constant 0 : i32
    return %c0_i32, %c0_i32_0 : i32, i32
  }
  func.func @transform_3(%arg0: i32) -> (i32, i32) {
    %c0_i32 = arith.constant 0 : i32
    %c0_i32_0 = arith.constant 0 : i32
    %c0_i32_1 = arith.constant 0 : i32
    return %c0_i32, %c0_i32_0 : i32, i32
  }
  func.func @transform_4(%arg0: i32) -> (i32, i32, i32) {
    %c0_i32 = arith.constant 0 : i32
    %c0_i32_0 = arith.constant 0 : i32
    %c0_i32_1 = arith.constant 0 : i32
    %c0_i32_2 = arith.constant 0 : i32
    return %c0_i32, %c0_i32_0, %c0_i32_1 : i32, i32, i32
  }
  func.func @transform_5(%arg0: i32) -> (i32, i32, i32) {
    %c0_i32 = arith.constant 0 : i32
    %c0_i32_0 = arith.constant 0 : i32
    %c0_i32_1 = arith.constant 0 : i32
    %c0_i32_2 = arith.constant 0 : i32
    return %c0_i32, %c0_i32_0, %c0_i32_1 : i32, i32, i32
  }
  func.func @transform_6(%arg0: i32) -> (i32, i32) {
    %c0_i32 = arith.constant 0 : i32
    %c0_i32_0 = arith.constant 0 : i32
    %c0_i32_1 = arith.constant 0 : i32
    return %c0_i32, %c0_i32_0 : i32, i32
  }
  func.func @transform_7(%arg0: i32) -> (i32, i32) {
    %c0_i32 = arith.constant 0 : i32
    %c0_i32_0 = arith.constant 0 : i32
    %c0_i32_1 = arith.constant 0 : i32
    return %c0_i32, %c0_i32_0 : i32, i32
  }
  func.func @transform_8(%arg0: i32) -> (i32, i32) {
    %c0_i32 = arith.constant 0 : i32
    %c0_i32_0 = arith.constant 0 : i32
    %c0_i32_1 = arith.constant 0 : i32
    return %c0_i32, %c0_i32_0 : i32, i32
  }
  func.func @transform_9(%arg0: i32) -> (i32, i32) {
    %c0_i32 = arith.constant 0 : i32
    %c0_i32_0 = arith.constant 0 : i32
    %c0_i32_1 = arith.constant 0 : i32
    return %c0_i32, %c0_i32_0 : i32, i32
  }
  func.func @transform_10(%arg0: i32) -> (i32, i32) {
    %c0_i32 = arith.constant 0 : i32
    %c0_i32_0 = arith.constant 0 : i32
    %c0_i32_1 = arith.constant 0 : i32
    return %c0_i32, %c0_i32_0 : i32, i32
  }
}

</mosaic_0001>

<llo_original>
// kernel: tpu_custom_call.1
$region0: #{tpu_custom_call.1}
  #allocation0 [shape = 'u32[]', space=smem, size = 0x4, offset = 0x4, fixed_abs, tag = 'smem constant byte address 0x4 - core index']
  #allocation1 [shape = 'u32[144,128]{1,0:T(1,128)}', space=vmem, size = 0x12000, scoped, tag = 'internal scratch']
  %s0 = inlined_call_operand.vmem [shape: bf16[40,24], index: 0, kind: input, shape index: {}]
  %s1 = inlined_call_operand.hbm [shape: bf16[24,40], index: 1, kind: input, shape index: {}]
  %s2 = inlined_call_operand.vmem [shape: f32[24,128], index: 2, kind: input, shape index: {}]
  %s3 = inlined_call_operand.hbm [shape: f32[40,128], index: 3, kind: input, shape index: {}]
  %s4 = inlined_call_operand.hbm [shape: bf16[6,128,128], index: 4, kind: input, shape index: {}]
  %s5 = inlined_call_operand.hbm [shape: bf16[6,128,128], index: 5, kind: input, shape index: {}]
  %s6 = inlined_call_operand.vmem [shape: f32[8,128], index: 6, kind: input, shape index: {}]
  %s7 = inlined_call_operand.hbm [shape: bf16[128,128], index: 7, kind: input, shape index: {}]
  %s8 = inlined_call_operand.vmem [shape: f32[1,128], index: 8, kind: input, shape index: {}]
  %s9 = inlined_call_operand.hbm [shape: f32[24,128], index: 9, kind: output, shape index: {0}]
  %s10 = inlined_call_operand.hbm [shape: f32[40,128], index: 10, kind: output, shape index: {1}]
  %11 = xla_tuple %s9, %s10
  %s12 = sld [smem:[#allocation0]]
  $region74: #{tpu_custom_call.1} parent=0
    _
  %s14 = ssub.s32 1, %s12
  %s15 = scalar_select 0, %s14, %s12
  $region1: #{tpu_custom_call.1} parent=0
    #allocation2 [shape = 'u8[6144]{0}', space=vmem, size = 0x1800, scoped, tag = 'input window, operand 1, single buffered']
    #allocation3 [shape = 's32[1]{0}', space=sflag, size = 0x4, scoped, tag = 'scoped memory for tpu_custom_call.1']
    #allocation4 [shape = 's32[1]{0}', space=sflag, size = 0x4, scoped, tag = 'scoped memory for tpu_custom_call.1']
    #allocation5 [shape = 'u8[20480]{0}', space=vmem, size = 0x5000, scoped, tag = 'input window, operand 3, single buffered']
    #allocation6 [shape = 's32[1]{0}', space=sflag, size = 0x4, scoped, tag = 'scoped memory for tpu_custom_call.1']
    #allocation7 [shape = 'u8[196608]{0}', space=vmem, size = 0x30000, scoped, tag = 'input window, operand 4, single buffered']
    #allocation8 [shape = 'u8[196608]{0}', space=vmem, size = 0x30000, scoped, tag = 'input window, operand 5, single buffered']
    #allocation9 [shape = 's32[1]{0}', space=sflag, size = 0x4, scoped, tag = 'scoped memory for tpu_custom_call.1']
    #allocation10 [shape = 'u8[32768]{0}', space=vmem, size = 0x8000, scoped, tag = 'input window, operand 7, single buffered']
    #allocation11 [shape = 'u8[12288]{0}', space=vmem, size = 0x3000, scoped, tag = 'output window, operand 0, single buffered']
    #allocation12 [shape = 'u8[20480]{0}', space=vmem, size = 0x5000, scoped, tag = 'output window, operand 1, single buffered']
    #allocation13 [shape = 's32[1]{0}', space=sflag, size = 0x4, scoped, tag = 'scoped memory for tpu_custom_call.1']
    %16 = vsyncpa [#allocation3], 0
    %17 = vsyncpa [#allocation6], 0
    %18 = vsyncpa [#allocation9], 0
    %19 = vsyncpa [#allocation4], 0
    %20 = vsyncpa [#allocation13], 0
    // Predicated region
    $region2: #{tpu_custom_call.1} parent=1 // pred_check
      _
    $region3: #{tpu_custom_call.1} parent=1 // pred_check_branch
      %22 = sbr.rel (0) target = $region5
    $region4: #{tpu_custom_call.1} parent=1 // pred_region
      _
    $region5: #{tpu_custom_call.1} parent=1 // pred_fallthru
      _
    // Predicated region
    $region6: #{tpu_custom_call.1} parent=1 // pred_check
      _
    $region7: #{tpu_custom_call.1} parent=1 // pred_check_branch
      %24 = sbr.rel (0) target = $region9
    $region8: #{tpu_custom_call.1} parent=1 // pred_region
      %s26 = ssub.s32 192, 192
      %27 = vsyncadd [#allocation3], %s26
      %s28 = sshll.u32 [#allocation2], 4
      %s29 = int_to_ptr.vmem [resolvable:$true] %s28
      %34 = dma.hbm_to_vmem [thread:$0]  %s1, 192, %s29, [#allocation3], 64, 64, 4
    $region9: #{tpu_custom_call.1} parent=1 // pred_fallthru
      _
    // Predicated region
    $region10: #{tpu_custom_call.1} parent=1 // pred_check
      _
    $region11: #{tpu_custom_call.1} parent=1 // pred_check_branch
      %36 = sbr.rel (0) target = $region13
    $region12: #{tpu_custom_call.1} parent=1 // pred_region
      _
    $region13: #{tpu_custom_call.1} parent=1 // pred_fallthru
      _
    // Predicated region
    $region14: #{tpu_custom_call.1} parent=1 // pred_check
      _
    $region15: #{tpu_custom_call.1} parent=1 // pred_check_branch
      %38 = sbr.rel (0) target = $region17
    $region16: #{tpu_custom_call.1} parent=1 // pred_region
      %s40 = ssub.s32 640, 640
      %41 = vsyncadd [#allocation6], %s40
      %s42 = sshll.u32 [#allocation5], 4
      %s43 = int_to_ptr.vmem [resolvable:$true] %s42
      %48 = dma.hbm_to_vmem [thread:$0]  %s3, 640, %s43, [#allocation6], 128, 128, 8
    $region17: #{tpu_custom_call.1} parent=1 // pred_fallthru
      _
    // Predicated region
    $region18: #{tpu_custom_call.1} parent=1 // pred_check
      _
    $region19: #{tpu_custom_call.1} parent=1 // pred_check_branch
      %50 = sbr.rel (0) target = $region21
    $region20: #{tpu_custom_call.1} parent=1 // pred_region
      %s52 = ssub.s32 6144, 6144
      %53 = vsyncadd [#allocation6], %s52
      %s54 = sshll.u32 [#allocation7], 4
      %s55 = int_to_ptr.vmem [resolvable:$true] %s54
      %60 = dma.hbm_to_vmem [thread:$0]  %s4, 6144, %s55, [#allocation6], 64, 64, 4
    $region21: #{tpu_custom_call.1} parent=1 // pred_fallthru
      _
    // Predicated region
    $region22: #{tpu_custom_call.1} parent=1 // pred_check
      _
    $region23: #{tpu_custom_call.1} parent=1 // pred_check_branch
      %62 = sbr.rel (0) target = $region25
    $region24: #{tpu_custom_call.1} parent=1 // pred_region
      %s64 = ssub.s32 6144, 6144
      %65 = vsyncadd [#allocation9], %s64
      %s66 = sshll.u32 [#allocation8], 4
      %s67 = int_to_ptr.vmem [resolvable:$true] %s66
      %72 = dma.hbm_to_vmem [thread:$0]  %s5, 6144, %s67, [#allocation9], 64, 64, 4
    $region25: #{tpu_custom_call.1} parent=1 // pred_fallthru
      _
    // Predicated region
    $region26: #{tpu_custom_call.1} parent=1 // pred_check
      _
    $region27: #{tpu_custom_call.1} parent=1 // pred_check_branch
      %74 = sbr.rel (0) target = $region29
    $region28: #{tpu_custom_call.1} parent=1 // pred_region
      _
    $region29: #{tpu_custom_call.1} parent=1 // pred_fallthru
      _
    // Predicated region
    $region30: #{tpu_custom_call.1} parent=1 // pred_check
      _
    $region31: #{tpu_custom_call.1} parent=1 // pred_check_branch
      %76 = sbr.rel (0) target = $region33
    $region32: #{tpu_custom_call.1} parent=1 // pred_region
      %s78 = ssub.s32 1024, 1024
      %79 = vsyncadd [#allocation9], %s78
      %s80 = sshll.u32 [#allocation10], 4
      %s81 = int_to_ptr.vmem [resolvable:$true] %s80
      %86 = dma.hbm_to_vmem [thread:$0]  %s7, 1024, %s81, [#allocation9], 64, 64, 4
    $region33: #{tpu_custom_call.1} parent=1 // pred_fallthru
      _
    // Predicated region
    $region34: #{tpu_custom_call.1} parent=1 // pred_check
      _
    $region35: #{tpu_custom_call.1} parent=1 // pred_check_branch
      %88 = sbr.rel (0) target = $region37
    $region36: #{tpu_custom_call.1} parent=1 // pred_region
      _
    $region37: #{tpu_custom_call.1} parent=1 // pred_fallthru
      _
    // Predicated region
    $region38: #{tpu_custom_call.1} parent=1 // pred_check
      _
    $region39: #{tpu_custom_call.1} parent=1 // pred_check_branch
      %90 = sbr.rel (0) target = $region41
    $region40: #{tpu_custom_call.1} parent=1 // pred_region
      %91 = dma.done [#allocation3], 192
    $region41: #{tpu_custom_call.1} parent=1 // pred_fallthru
      _
    // Predicated region
    $region42: #{tpu_custom_call.1} parent=1 // pred_check
      _
    $region43: #{tpu_custom_call.1} parent=1 // pred_check_branch
      %93 = sbr.rel (0) target = $region45
    $region44: #{tpu_custom_call.1} parent=1 // pred_region
      %94 = dma.done [#allocation6], 640
    $region45: #{tpu_custom_call.1} parent=1 // pred_fallthru
      _
    // Predicated region
    $region46: #{tpu_custom_call.1} parent=1 // pred_check
      _
    $region47: #{tpu_custom_call.1} parent=1 // pred_check_branch
      %96 = sbr.rel (0) target = $region49
    $region48: #{tpu_custom_call.1} parent=1 // pred_region
      %97 = dma.done [#allocation6], 6144
    $region49: #{tpu_custom_call.1} parent=1 // pred_fallthru
      _
    // Predicated region
    $region50: #{tpu_custom_call.1} parent=1 // pred_check
      _
    $region51: #{tpu_custom_call.1} parent=1 // pred_check_branch
      %99 = sbr.rel (0) target = $region53
    $region52: #{tpu_custom_call.1} parent=1 // pred_region
      %100 = dma.done [#allocation9], 6144
    $region53: #{tpu_custom_call.1} parent=1 // pred_fallthru
      _
    // Predicated region
    $region54: #{tpu_custom_call.1} parent=1 // pred_check
      _
    $region55: #{tpu_custom_call.1} parent=1 // pred_check_branch
      %102 = sbr.rel (0) target = $region57
    $region56: #{tpu_custom_call.1} parent=1 // pred_region
      %103 = dma.done [#allocation9], 1024
    $region57: #{tpu_custom_call.1} parent=1 // pred_fallthru
      _
    %v105 = vld [vmem:[%s0] sm:$0xf]
    %v106 = vld [vmem:[%s0 + $0x4] sm:$0xf]
    %v107 = vld [vmem:[%s0 + $0x8] sm:$0xf]
    %v108 = vld [vmem:[%s0 + $0xc] sm:$0xf]
    %v109 = vld [vmem:[%s0 + $0x10] sm:$0xf]
    %v110 = vld [vmem:[#allocation2] sm:$0xf]
    %v111 = vld [vmem:[#allocation2 + $0x4] sm:$0xf]
    %v112 = vld [vmem:[#allocation2 + $0x8] sm:$0xf]
    %v113 = vld [vmem:[%s2] sm:$0xff]
    %v114 = vld [vmem:[%s2 + $0x8] sm:$0xff]
    %v115 = vld [vmem:[%s2 + $0x10] sm:$0xff]
    %v116 = vld [vmem:[#allocation5] sm:$0xff]
    %v117 = vld [vmem:[#allocation5 + $0x8] sm:$0xff]
    %v118 = vld [vmem:[#allocation5 + $0x10] sm:$0xff]
    %v119 = vld [vmem:[#allocation5 + $0x18] sm:$0xff]
    %v120 = vld [vmem:[#allocation5 + $0x20] sm:$0xff]
    %v121 = vpack.c.bf16 %v114, %v113
    %v122 = vpack.c.bf16 %v115, %v115
    %v123 = vpack.c.bf16 %v117, %v116
    %v124 = vpack.c.bf16 %v119, %v118
    %v125 = vpack.c.bf16 %v120, %v120
    %v126 = vld [vmem:[#allocation7] sm:$0xf]
    %v127 = vld [vmem:[#allocation7 + $0x4] sm:$0xf]
    %v128 = vld [vmem:[#allocation7 + $0x8] sm:$0xf]
    %v129 = vld [vmem:[#allocation7 + $0xc] sm:$0xf]
    %v130 = vld [vmem:[#allocation7 + $0x10] sm:$0xf]
    %v131 = vld [vmem:[#allocation7 + $0x14] sm:$0xf]
    %v132 = vld [vmem:[#allocation7 + $0x18] sm:$0xf]
    %v133 = vld [vmem:[#allocation7 + $0x1c] sm:$0xf]
    %v134 = vld [vmem:[#allocation7 + $0x20] sm:$0xf]
    %v135 = vld [vmem:[#allocation7 + $0x24] sm:$0xf]
    %v136 = vld [vmem:[#allocation7 + $0x28] sm:$0xf]
    %v137 = vld [vmem:[#allocation7 + $0x2c] sm:$0xf]
    %v138 = vld [vmem:[#allocation7 + $0x30] sm:$0xf]
    %v139 = vld [vmem:[#allocation7 + $0x34] sm:$0xf]
    %v140 = vld [vmem:[#allocation7 + $0x38] sm:$0xf]
    %v141 = vld [vmem:[#allocation7 + $0x3c] sm:$0xf]
    %v158 = vunpack.c.l.b16 %v126
    %v159 = vunpack.c.l.b16 %v127
    %v160 = vunpack.c.l.b16 %v128
    %v161 = vunpack.c.l.b16 %v129
    %v162 = vunpack.c.l.b16 %v130
    %v163 = vunpack.c.l.b16 %v131
    %v164 = vunpack.c.l.b16 %v132
    %v165 = vunpack.c.l.b16 %v133
    %v166 = vunpack.c.l.b16 %v134
    %v167 = vunpack.c.l.b16 %v135
    %v168 = vunpack.c.l.b16 %v136
    %v169 = vunpack.c.l.b16 %v137
    %v170 = vunpack.c.l.b16 %v138
    %v171 = vunpack.c.l.b16 %v139
    %v172 = vunpack.c.l.b16 %v140
    %v173 = vunpack.c.l.b16 %v141
    %v174 = vpack.c.b16 %v159, %v158
    %v175 = vpack.c.b16 %v161, %v160
    %v176 = vpack.c.b16 %v163, %v162
    %v177 = vpack.c.b16 %v165, %v164
    %v178 = vpack.c.b16 %v167, %v166
    %v179 = vpack.c.b16 %v169, %v168
    %v180 = vpack.c.b16 %v171, %v170
    %v181 = vpack.c.b16 %v173, %v172
    %190 = vmatprep.subr.bf16.mxu0 0
    %191 = vmatpush1.bf16.msra.mxu0 %v181
    %192 = vmatprep.subr.bf16.mxu0 0
    %193 = vmatpush1.bf16.msra.mxu0 %v180
    %194 = vmatprep.subr.bf16.mxu0 0
    %195 = vmatpush1.bf16.msra.mxu0 %v179
    %196 = vmatprep.subr.bf16.mxu0 0
    %197 = vmatpush1.bf16.msra.mxu0 %v178
    %198 = vmatprep.subr.bf16.mxu0 0
    %199 = vmatpush1.bf16.msra.mxu0 %v177
    %200 = vmatprep.subr.bf16.mxu0 0
    %201 = vmatpush1.bf16.msra.mxu0 %v176
    %202 = vmatprep.subr.bf16.mxu0 0
    %203 = vmatpush1.bf16.msra.mxu0 %v175
    %204 = vmatprep.subr.bf16.mxu0 0
    %205 = vmatpush1.bf16.msra.mxu0 %v174
    %206 = vmatprep.subr.bf16.mxu0 0
    %207 = vmatpush2.bf16.msra.mxu0 0
    %208 = vmatprep.subr.bf16.mxu0 0
    %209 = vmatpush2.bf16.msra.mxu0 0
    %210 = vmatprep.subr.bf16.mxu0 0
    %211 = vmatpush2.bf16.msra.mxu0 0
    %212 = vmatprep.subr.bf16.mxu0 0
    %213 = vmatpush2.bf16.msra.mxu0 0
    %214 = vmatprep.subr.bf16.mxu0 0
    %215 = vmatpush2.bf16.msra.mxu0 0
    %216 = vmatprep.subr.bf16.mxu0 0
    %217 = vmatpush2.bf16.msra.mxu0 0
    %218 = vmatprep.subr.bf16.mxu0 0
    %219 = vmatpush2.bf16.msra.mxu0 0
    %220 = vmatprep.subr.bf16.mxu0 0
    %221 = vmatpush2.bf16.msra.mxu0 0
    %222 = vmatprep.mubr.bf16.mxu0 0
    %223 = vmatmul.mubr.bf16.gmra.mxu0 %v121
    %v224 = vpop.f32.mrf.mxu0
    %v225 = vadd.f32 0.0, %v224
    %v226 = vpop.f32.mrf.mxu0
    %v227 = vpop.f32.mrf.mxu0
    %v228 = vadd.f32 0.0, %v227
    %v229 = vpop.f32.mrf.mxu0
    %230 = vmatprep.mubr.bf16.mxu0 0
    %231 = vmatmul.mubr.bf16.gmra.mxu0 %v122
    %v232 = vpop.f32.mrf.mxu0
    %v233 = vadd.f32 0.0, %v232
    %v234 = vpop.f32.mrf.mxu0
    %v235 = vpop.f32.mrf.mxu0
    %v236 = vpop.f32.mrf.mxu0
    %237 = vdwg.mxu0
    %s238 = scalar_lea.vmem [#allocation7], 64
    %v239 = vld [vmem:[%s238] sm:$0xf]
    %v240 = vld [vmem:[%s238 + $0x4] sm:$0xf]
    %v241 = vld [vmem:[%s238 + $0x8] sm:$0xf]
    %v242 = vld [vmem:[%s238 + $0xc] sm:$0xf]
    %v243 = vld [vmem:[%s238 + $0x10] sm:$0xf]
    %v244 = vld [vmem:[%s238 + $0x14] sm:$0xf]
    %v245 = vld [vmem:[%s238 + $0x18] sm:$0xf]
    %v246 = vld [vmem:[%s238 + $0x1c] sm:$0xf]
    %v247 = vld [vmem:[%s238 + $0x20] sm:$0xf]
    %v248 = vld [vmem:[%s238 + $0x24] sm:$0xf]
    %v249 = vld [vmem:[%s238 + $0x28] sm:$0xf]
    %v250 = vld [vmem:[%s238 + $0x2c] sm:$0xf]
    %v251 = vld [vmem:[%s238 + $0x30] sm:$0xf]
    %v252 = vld [vmem:[%s238 + $0x34] sm:$0xf]
    %v253 = vld [vmem:[%s238 + $0x38] sm:$0xf]
    %v254 = vld [vmem:[%s238 + $0x3c] sm:$0xf]
    %v271 = vunpack.c.l.b16 %v239
    %v272 = vunpack.c.l.b16 %v240
    %v273 = vunpack.c.l.b16 %v241
    %v274 = vunpack.c.l.b16 %v242
    %v275 = vunpack.c.l.b16 %v243
    %v276 = vunpack.c.l.b16 %v244
    %v277 = vunpack.c.l.b16 %v245
    %v278 = vunpack.c.l.b16 %v246
    %v279 = vunpack.c.l.b16 %v247
    %v280 = vunpack.c.l.b16 %v248
    %v281 = vunpack.c.l.b16 %v249
    %v282 = vunpack.c.l.b16 %v250
    %v283 = vunpack.c.l.b16 %v251
    %v284 = vunpack.c.l.b16 %v252
    %v285 = vunpack.c.l.b16 %v253
    %v286 = vunpack.c.l.b16 %v254
    %v287 = vpack.c.b16 %v272, %v271
    %v288 = vpack.c.b16 %v274, %v273
    %v289 = vpack.c.b16 %v276, %v275
    %v290 = vpack.c.b16 %v278, %v277
    %v291 = vpack.c.b16 %v280, %v279
    %v292 = vpack.c.b16 %v282, %v281
    %v293 = vpack.c.b16 %v284, %v283
    %v294 = vpack.c.b16 %v286, %v285
    %303 = vmatprep.subr.bf16.mxu0 0
    %304 = vmatpush1.bf16.msra.mxu0 %v294
    %305 = vmatprep.subr.bf16.mxu0 0
    %306 = vmatpush1.bf16.msra.mxu0 %v293
    %307 = vmatprep.subr.bf16.mxu0 0
    %308 = vmatpush1.bf16.msra.mxu0 %v292
    %309 = vmatprep.subr.bf16.mxu0 0
    %310 = vmatpush1.bf16.msra.mxu0 %v291
    %311 = vmatprep.subr.bf16.mxu0 0
    %312 = vmatpush1.bf16.msra.mxu0 %v290
    %313 = vmatprep.subr.bf16.mxu0 0
    %314 = vmatpush1.bf16.msra.mxu0 %v289
    %315 = vmatprep.subr.bf16.mxu0 0
    %316 = vmatpush1.bf16.msra.mxu0 %v288
    %317 = vmatprep.subr.bf16.mxu0 0
    %318 = vmatpush1.bf16.msra.mxu0 %v287
    %319 = vmatprep.subr.bf16.mxu0 0
    %320 = vmatpush2.bf16.msra.mxu0 0
    %321 = vmatprep.subr.bf16.mxu0 0
    %322 = vmatpush2.bf16.msra.mxu0 0
    %323 = vmatprep.subr.bf16.mxu0 0
    %324 = vmatpush2.bf16.msra.mxu0 0
    %325 = vmatprep.subr.bf16.mxu0 0
    %326 = vmatpush2.bf16.msra.mxu0 0
    %327 = vmatprep.subr.bf16.mxu0 0
    %328 = vmatpush2.bf16.msra.mxu0 0
    %329 = vmatprep.subr.bf16.mxu0 0
    %330 = vmatpush2.bf16.msra.mxu0 0
    %331 = vmatprep.subr.bf16.mxu0 0
    %332 = vmatpush2.bf16.msra.mxu0 0
    %333 = vmatprep.subr.bf16.mxu0 0
    %334 = vmatpush2.bf16.msra.mxu0 0
    %335 = vmatprep.mubr.bf16.mxu0 0
    %336 = vmatmul.mubr.bf16.gmra.mxu0 %v123
    %v337 = vpop.f32.mrf.mxu0
    %v338 = vadd.f32 0.0, %v337
    %v339 = vpop.f32.mrf.mxu0
    %v340 = vpop.f32.mrf.mxu0
    %v341 = vadd.f32 0.0, %v340
    %v342 = vpop.f32.mrf.mxu0
    %343 = vmatprep.mubr.bf16.mxu0 0
    %344 = vmatmul.mubr.bf16.gmra.mxu0 %v124
    %v345 = vpop.f32.mrf.mxu0
    %v346 = vadd.f32 0.0, %v345
    %v347 = vpop.f32.mrf.mxu0
    %v348 = vpop.f32.mrf.mxu0
    %v349 = vadd.f32 0.0, %v348
    %v350 = vpop.f32.mrf.mxu0
    %351 = vmatprep.mubr.bf16.mxu0 0
    %352 = vmatmul.mubr.bf16.gmra.mxu0 %v125
    %v353 = vpop.f32.mrf.mxu0
    %v354 = vadd.f32 0.0, %v353
    %v355 = vpop.f32.mrf.mxu0
    %v356 = vpop.f32.mrf.mxu0
    %v357 = vpop.f32.mrf.mxu0
    %358 = vdwg.mxu0
    %v359 = vpack.c.bf16 %v228, %v225
    %v360 = vpack.c.bf16 %v233, %v233
    %v361 = vld [vmem:[#allocation8] sm:$0xf]
    %v362 = vld [vmem:[#allocation8 + $0x4] sm:$0xf]
    %v363 = vld [vmem:[#allocation8 + $0x8] sm:$0xf]
    %v364 = vld [vmem:[#allocation8 + $0xc] sm:$0xf]
    %v365 = vld [vmem:[#allocation8 + $0x10] sm:$0xf]
    %v366 = vld [vmem:[#allocation8 + $0x14] sm:$0xf]
    %v367 = vld [vmem:[#allocation8 + $0x18] sm:$0xf]
    %v368 = vld [vmem:[#allocation8 + $0x1c] sm:$0xf]
    %v369 = vld [vmem:[#allocation8 + $0x20] sm:$0xf]
    %v370 = vld [vmem:[#allocation8 + $0x24] sm:$0xf]
    %v371 = vld [vmem:[#allocation8 + $0x28] sm:$0xf]
    %v372 = vld [vmem:[#allocation8 + $0x2c] sm:$0xf]
    %v373 = vld [vmem:[#allocation8 + $0x30] sm:$0xf]
    %v374 = vld [vmem:[#allocation8 + $0x34] sm:$0xf]
    %v375 = vld [vmem:[#allocation8 + $0x38] sm:$0xf]
    %v376 = vld [vmem:[#allocation8 + $0x3c] sm:$0xf]
    %v393 = vunpack.c.l.b16 %v361
    %v394 = vunpack.c.l.b16 %v362
    %v395 = vunpack.c.l.b16 %v363
    %v396 = vunpack.c.l.b16 %v364
    %v397 = vunpack.c.l.b16 %v365
    %v398 = vunpack.c.l.b16 %v366
    %v399 = vunpack.c.l.b16 %v367
    %v400 = vunpack.c.l.b16 %v368
    %v401 = vunpack.c.l.b16 %v369
    %v402 = vunpack.c.l.b16 %v370
    %v403 = vunpack.c.l.b16 %v371
    %v404 = vunpack.c.l.b16 %v372
    %v405 = vunpack.c.l.b16 %v373
    %v406 = vunpack.c.l.b16 %v374
    %v407 = vunpack.c.l.b16 %v375
    %v408 = vunpack.c.l.b16 %v376
    %v409 = vpack.c.b16 %v394, %v393
    %v410 = vpack.c.b16 %v396, %v395
    %v411 = vpack.c.b16 %v398, %v397
    %v412 = vpack.c.b16 %v400, %v399
    %v413 = vpack.c.b16 %v402, %v401
    %v414 = vpack.c.b16 %v404, %v403
    %v415 = vpack.c.b16 %v406, %v405
    %v416 = vpack.c.b16 %v408, %v407
    %425 = vmatprep.subr.bf16.mxu0 0
    %426 = vmatpush1.bf16.msra.mxu0 %v416
    %427 = vmatprep.subr.bf16.mxu0 0
    %428 = vmatpush1.bf16.msra.mxu0 %v415
    %429 = vmatprep.subr.bf16.mxu0 0
    %430 = vmatpush1.bf16.msra.mxu0 %v414
    %431 = vmatprep.subr.bf16.mxu0 0
    %432 = vmatpush1.bf16.msra.mxu0 %v413
    %433 = vmatprep.subr.bf16.mxu0 0
    %434 = vmatpush1.bf16.msra.mxu0 %v412
    %435 = vmatprep.subr.bf16.mxu0 0
    %436 = vmatpush1.bf16.msra.mxu0 %v411
    %437 = vmatprep.subr.bf16.mxu0 0
    %438 = vmatpush1.bf16.msra.mxu0 %v410
    %439 = vmatprep.subr.bf16.mxu0 0
    %440 = vmatpush1.bf16.msra.mxu0 %v409
    %441 = vmatprep.subr.bf16.mxu0 0
    %442 = vmatpush2.bf16.msra.mxu0 0
    %443 = vmatprep.subr.bf16.mxu0 0
    %444 = vmatpush2.bf16.msra.mxu0 0
    %445 = vmatprep.subr.bf16.mxu0 0
    %446 = vmatpush2.bf16.msra.mxu0 0
    %447 = vmatprep.subr.bf16.mxu0 0
    %448 = vmatpush2.bf16.msra.mxu0 0
    %449 = vmatprep.subr.bf16.mxu0 0
    %450 = vmatpush2.bf16.msra.mxu0 0
    %451 = vmatprep.subr.bf16.mxu0 0
    %452 = vmatpush2.bf16.msra.mxu0 0
    %453 = vmatprep.subr.bf16.mxu0 0
    %454 = vmatpush2.bf16.msra.mxu0 0
    %455 = vmatprep.subr.bf16.mxu0 0
    %456 = vmatpush2.bf16.msra.mxu0 0
    %457 = vmatprep.mubr.bf16.mxu0 0
    %458 = vmatmul.mubr.bf16.gmra.mxu0 %v123
    %v459 = vpop.f32.mrf.mxu0
    %v460 = vadd.f32 0.0, %v459
    %v461 = vpop.f32.mrf.mxu0
    %v462 = vpop.f32.mrf.mxu0
    %v463 = vadd.f32 0.0, %v462
    %v464 = vpop.f32.mrf.mxu0
    %465 = vmatprep.mubr.bf16.mxu0 0
    %466 = vmatmul.mubr.bf16.gmra.mxu0 %v124
    %v467 = vpop.f32.mrf.mxu0
    %v468 = vadd.f32 0.0, %v467
    %v469 = vpop.f32.mrf.mxu0
    %v470 = vpop.f32.mrf.mxu0
    %v471 = vadd.f32 0.0, %v470
    %v472 = vpop.f32.mrf.mxu0
    %473 = vmatprep.mubr.bf16.mxu0 0
    %474 = vmatmul.mubr.bf16.gmra.mxu0 %v125
    %v475 = vpop.f32.mrf.mxu0
    %v476 = vadd.f32 0.0, %v475
    %v477 = vpop.f32.mrf.mxu0
    %v478 = vpop.f32.mrf.mxu0
    %v479 = vpop.f32.mrf.mxu0
    %480 = vdwg.mxu0
    %v486 = vunpack.c.l.b16 %v105
    %v487 = vunpack.c.l.b16 %v106
    %v488 = vunpack.c.l.b16 %v107
    %v489 = vunpack.c.l.b16 %v108
    %v490 = vunpack.c.l.b16 %v109
    %v491 = vpack.c.b16 %v487, %v486
    %v492 = vpack.c.b16 %v489, %v488
    %v493 = vpack.c.b16 %v490, %v490
    %vm494 = vcmask 195584
    %v496 = vsel %vm494, %v491, 0
    %v499 = vsel %vm494, %v492, 0
    %v502 = vsel %vm494, %v493, 0
    %vm504 = vcmask 1043456
    %v506 = vsel %vm504, %v360, 0
    %508 = vmatprep.subr.bf16.mxu0 0
    %509 = vmatpush1.bf16.msra.mxu0 0
    %510 = vmatprep.subr.bf16.mxu0 0
    %511 = vmatpush1.bf16.msra.mxu0 0
    %512 = vmatprep.subr.bf16.mxu0 0
    %513 = vmatpush1.bf16.msra.mxu0 0
    %514 = vmatprep.subr.bf16.mxu0 0
    %515 = vmatpush1.bf16.msra.mxu0 0
    %516 = vmatprep.subr.bf16.mxu0 0
    %517 = vmatpush1.bf16.msra.mxu0 0
    %518 = vmatprep.subr.bf16.mxu0 0
    %519 = vmatpush1.bf16.msra.mxu0 0
    %520 = vmatprep.subr.bf16.mxu0 0
    %521 = vmatpush1.bf16.msra.mxu0 %v506
    %522 = vmatprep.subr.bf16.mxu0 0
    %523 = vmatpush1.bf16.msra.mxu0 %v359
    %524 = vmatprep.subr.bf16.mxu0 0
    %525 = vmatpush2.bf16.msra.mxu0 0
    %526 = vmatprep.subr.bf16.mxu0 0
    %527 = vmatpush2.bf16.msra.mxu0 0
    %528 = vmatprep.subr.bf16.mxu0 0
    %529 = vmatpush2.bf16.msra.mxu0 0
    %530 = vmatprep.subr.bf16.mxu0 0
    %531 = vmatpush2.bf16.msra.mxu0 0
    %532 = vmatprep.subr.bf16.mxu0 0
    %533 = vmatpush2.bf16.msra.mxu0 0
    %534 = vmatprep.subr.bf16.mxu0 0
    %535 = vmatpush2.bf16.msra.mxu0 0
    %536 = vmatprep.subr.bf16.mxu0 0
    %537 = vmatpush2.bf16.msra.mxu0 0
    %538 = vmatprep.subr.bf16.mxu0 0
    %539 = vmatpush2.bf16.msra.mxu0 0
    %540 = vmatprep.mubr.bf16.mxu0 0
    %541 = vmatmul.mubr.bf16.gmra.mxu0 %v496
    %v542 = vpop.f32.mrf.mxu0
    %v543 = vadd.f32 %v460, %v542
    %v544 = vpop.f32.mrf.mxu0
    %v545 = vpop.f32.mrf.mxu0
    %v546 = vadd.f32 %v463, %v545
    %v547 = vpop.f32.mrf.mxu0
    %548 = vmatprep.mubr.bf16.mxu0 0
    %549 = vmatmul.mubr.bf16.gmra.mxu0 %v499
    %v550 = vpop.f32.mrf.mxu0
    %v551 = vadd.f32 %v468, %v550
    %v552 = vpop.f32.mrf.mxu0
    %v553 = vpop.f32.mrf.mxu0
    %v554 = vadd.f32 %v471, %v553
    %v555 = vpop.f32.mrf.mxu0
    %556 = vmatprep.mubr.bf16.mxu0 0
    %557 = vmatmul.mubr.bf16.gmra.mxu0 %v502
    %v558 = vpop.f32.mrf.mxu0
    %v559 = vadd.f32 %v476, %v558
    %v560 = vpop.f32.mrf.mxu0
    %v561 = vpop.f32.mrf.mxu0
    %v562 = vpop.f32.mrf.mxu0
    %563 = vdwg.mxu0
    %v564 = vld [vmem:[%s6] sm:$0x1]
    %v565 = vlaneseq
    %v566 = vshrl.u32 %v565, 7
    %v567 = vsub.s32 0, %v566
    %v568 = vrot.slane %v564, %v567
    %v569 = vadd.f32 %v543, %v568
    %v570 = vadd.f32 %v546, %v568
    %v571 = vadd.f32 %v551, %v568
    %v572 = vadd.f32 %v554, %v568
    %v573 = vadd.f32 %v559, %v568
    %v574 = vpack.c.bf16 %v341, %v338
    %v575 = vpack.c.bf16 %v349, %v346
    %v576 = vpack.c.bf16 %v354, %v354
    %s577 = scalar_lea.vmem [#allocation8], 64
    %v578 = vld [vmem:[%s577] sm:$0xf]
    %v579 = vld [vmem:[%s577 + $0x4] sm:$0xf]
    %v580 = vld [vmem:[%s577 + $0x8] sm:$0xf]
    %v581 = vld [vmem:[%s577 + $0xc] sm:$0xf]
    %v582 = vld [vmem:[%s577 + $0x10] sm:$0xf]
    %v583 = vld [vmem:[%s577 + $0x14] sm:$0xf]
    %v584 = vld [vmem:[%s577 + $0x18] sm:$0xf]
    %v585 = vld [vmem:[%s577 + $0x1c] sm:$0xf]
    %v586 = vld [vmem:[%s577 + $0x20] sm:$0xf]
    %v587 = vld [vmem:[%s577 + $0x24] sm:$0xf]
    %v588 = vld [vmem:[%s577 + $0x28] sm:$0xf]
    %v589 = vld [vmem:[%s577 + $0x2c] sm:$0xf]
    %v590 = vld [vmem:[%s577 + $0x30] sm:$0xf]
    %v591 = vld [vmem:[%s577 + $0x34] sm:$0xf]
    %v592 = vld [vmem:[%s577 + $0x38] sm:$0xf]
    %v593 = vld [vmem:[%s577 + $0x3c] sm:$0xf]
    %v610 = vunpack.c.l.b16 %v578
    %v611 = vunpack.c.l.b16 %v579
    %v612 = vunpack.c.l.b16 %v580
    %v613 = vunpack.c.l.b16 %v581
    %v614 = vunpack.c.l.b16 %v582
    %v615 = vunpack.c.l.b16 %v583
    %v616 = vunpack.c.l.b16 %v584
    %v617 = vunpack.c.l.b16 %v585
    %v618 = vunpack.c.l.b16 %v586
    %v619 = vunpack.c.l.b16 %v587
    %v620 = vunpack.c.l.b16 %v588
    %v621 = vunpack.c.l.b16 %v589
    %v622 = vunpack.c.l.b16 %v590
    %v623 = vunpack.c.l.b16 %v591
    %v624 = vunpack.c.l.b16 %v592
    %v625 = vunpack.c.l.b16 %v593
    %v626 = vpack.c.b16 %v611, %v610
    %v627 = vpack.c.b16 %v613, %v612
    %v628 = vpack.c.b16 %v615, %v614
    %v629 = vpack.c.b16 %v617, %v616
    %v630 = vpack.c.b16 %v619, %v618
    %v631 = vpack.c.b16 %v621, %v620
    %v632 = vpack.c.b16 %v623, %v622
    %v633 = vpack.c.b16 %v625, %v624
    %642 = vmatprep.subr.bf16.mxu0 0
    %643 = vmatpush1.bf16.msra.mxu0 %v633
    %644 = vmatprep.subr.bf16.mxu0 0
    %645 = vmatpush1.bf16.msra.mxu0 %v632
    %646 = vmatprep.subr.bf16.mxu0 0
    %647 = vmatpush1.bf16.msra.mxu0 %v631
    %648 = vmatprep.subr.bf16.mxu0 0
    %649 = vmatpush1.bf16.msra.mxu0 %v630
    %650 = vmatprep.subr.bf16.mxu0 0
    %651 = vmatpush1.bf16.msra.mxu0 %v629
    %652 = vmatprep.subr.bf16.mxu0 0
    %653 = vmatpush1.bf16.msra.mxu0 %v628
    %654 = vmatprep.subr.bf16.mxu0 0
    %655 = vmatpush1.bf16.msra.mxu0 %v627
    %656 = vmatprep.subr.bf16.mxu0 0
    %657 = vmatpush1.bf16.msra.mxu0 %v626
    %658 = vmatprep.subr.bf16.mxu0 0
    %659 = vmatpush2.bf16.msra.mxu0 0
    %660 = vmatprep.subr.bf16.mxu0 0
    %661 = vmatpush2.bf16.msra.mxu0 0
    %662 = vmatprep.subr.bf16.mxu0 0
    %663 = vmatpush2.bf16.msra.mxu0 0
    %664 = vmatprep.subr.bf16.mxu0 0
    %665 = vmatpush2.bf16.msra.mxu0 0
    %666 = vmatprep.subr.bf16.mxu0 0
    %667 = vmatpush2.bf16.msra.mxu0 0
    %668 = vmatprep.subr.bf16.mxu0 0
    %669 = vmatpush2.bf16.msra.mxu0 0
    %670 = vmatprep.subr.bf16.mxu0 0
    %671 = vmatpush2.bf16.msra.mxu0 0
    %672 = vmatprep.subr.bf16.mxu0 0
    %673 = vmatpush2.bf16.msra.mxu0 0
    %674 = vmatprep.mubr.bf16.mxu0 0
    %675 = vmatmul.mubr.bf16.gmra.mxu0 %v121
    %v676 = vpop.f32.mrf.mxu0
    %v677 = vadd.f32 0.0, %v676
    %v678 = vpop.f32.mrf.mxu0
    %v679 = vpop.f32.mrf.mxu0
    %v680 = vadd.f32 0.0, %v679
    %v681 = vpop.f32.mrf.mxu0
    %682 = vmatprep.mubr.bf16.mxu0 0
    %683 = vmatmul.mubr.bf16.gmra.mxu0 %v122
    %v684 = vpop.f32.mrf.mxu0
    %v685 = vadd.f32 0.0, %v684
    %v686 = vpop.f32.mrf.mxu0
    %v687 = vpop.f32.mrf.mxu0
    %v688 = vpop.f32.mrf.mxu0
    %689 = vdwg.mxu0
    %v693 = vunpack.c.l.b16 %v110
    %v694 = vunpack.c.l.b16 %v111
    %v695 = vunpack.c.l.b16 %v112
    %v696 = vpack.c.b16 %v694, %v693
    %v697 = vpack.c.b16 %v695, %v695
    %vm698 = vcmask 326656
    %v700 = vsel %vm698, %v696, 0
    %v703 = vsel %vm698, %v697, 0
    %v706 = vsel %vm504, %v576, 0
    %708 = vmatprep.subr.bf16.mxu0 0
    %709 = vmatpush1.bf16.msra.mxu0 0
    %710 = vmatprep.subr.bf16.mxu0 0
    %711 = vmatpush1.bf16.msra.mxu0 0
    %712 = vmatprep.subr.bf16.mxu0 0
    %713 = vmatpush1.bf16.msra.mxu0 0
    %714 = vmatprep.subr.bf16.mxu0 0
    %715 = vmatpush1.bf16.msra.mxu0 0
    %716 = vmatprep.subr.bf16.mxu0 0
    %717 = vmatpush1.bf16.msra.mxu0 0
    %718 = vmatprep.subr.bf16.mxu0 0
    %719 = vmatpush1.bf16.msra.mxu0 %v706
    %720 = vmatprep.subr.bf16.mxu0 0
    %721 = vmatpush1.bf16.msra.mxu0 %v575
    %722 = vmatprep.subr.bf16.mxu0 0
    %723 = vmatpush1.bf16.msra.mxu0 %v574
    %724 = vmatprep.subr.bf16.mxu0 0
    %725 = vmatpush2.bf16.msra.mxu0 0
    %726 = vmatprep.subr.bf16.mxu0 0
    %727 = vmatpush2.bf16.msra.mxu0 0
    %728 = vmatprep.subr.bf16.mxu0 0
    %729 = vmatpush2.bf16.msra.mxu0 0
    %730 = vmatprep.subr.bf16.mxu0 0
    %731 = vmatpush2.bf16.msra.mxu0 0
    %732 = vmatprep.subr.bf16.mxu0 0
    %733 = vmatpush2.bf16.msra.mxu0 0
    %734 = vmatprep.subr.bf16.mxu0 0
    %735 = vmatpush2.bf16.msra.mxu0 0
    %736 = vmatprep.subr.bf16.mxu0 0
    %737 = vmatpush2.bf16.msra.mxu0 0
    %738 = vmatprep.subr.bf16.mxu0 0
    %739 = vmatpush2.bf16.msra.mxu0 0
    %740 = vmatprep.mubr.bf16.mxu0 0
    %741 = vmatmul.mubr.bf16.gmra.mxu0 %v700
    %v742 = vpop.f32.mrf.mxu0
    %v743 = vadd.f32 %v677, %v742
    %v744 = vpop.f32.mrf.mxu0
    %v745 = vpop.f32.mrf.mxu0
    %v746 = vadd.f32 %v680, %v745
    %v747 = vpop.f32.mrf.mxu0
    %748 = vmatprep.mubr.bf16.mxu0 0
    %749 = vmatmul.mubr.bf16.gmra.mxu0 %v703
    %v750 = vpop.f32.mrf.mxu0
    %v751 = vadd.f32 %v685, %v750
    %v752 = vpop.f32.mrf.mxu0
    %v753 = vpop.f32.mrf.mxu0
    %v754 = vpop.f32.mrf.mxu0
    %755 = vdwg.mxu0
    %v756 = vld [vmem:[%s6 + $0x1] sm:$0x1]
    %v757 = vlaneseq
    %v758 = vshrl.u32 %v757, 7
    %v759 = vsub.s32 0, %v758
    %v760 = vrot.slane %v756, %v759
    %v761 = vadd.f32 %v743, %v760
    %v762 = vadd.f32 %v746, %v760
    %v763 = vadd.f32 %v751, %v760
    %v764 = vmax.f32 %v761, 0.0
    %v765 = vmax.f32 %v762, 0.0
    %v766 = vmax.f32 %v763, 0.0
    %v767 = vmax.f32 %v569, 0.0
    %v768 = vmax.f32 %v570, 0.0
    %v769 = vmax.f32 %v571, 0.0
    %v770 = vmax.f32 %v572, 0.0
    %v771 = vmax.f32 %v573, 0.0
    %v772 = vpack.c.bf16 %v765, %v764
    %v773 = vpack.c.bf16 %v766, %v766
    %v774 = vpack.c.bf16 %v768, %v767
    %v775 = vpack.c.bf16 %v770, %v769
    %v776 = vpack.c.bf16 %v771, %v771
    %s777 = scalar_lea.vmem [#allocation7], 128
    %v778 = vld [vmem:[%s777] sm:$0xf]
    %v779 = vld [vmem:[%s777 + $0x4] sm:$0xf]
    %v780 = vld [vmem:[%s777 + $0x8] sm:$0xf]
    %v781 = vld [vmem:[%s777 + $0xc] sm:$0xf]
    %v782 = vld [vmem:[%s777 + $0x10] sm:$0xf]
    %v783 = vld [vmem:[%s777 + $0x14] sm:$0xf]
    %v784 = vld [vmem:[%s777 + $0x18] sm:$0xf]
    %v785 = vld [vmem:[%s777 + $0x1c] sm:$0xf]
    %v786 = vld [vmem:[%s777 + $0x20] sm:$0xf]
    %v787 = vld [vmem:[%s777 + $0x24] sm:$0xf]
    %v788 = vld [vmem:[%s777 + $0x28] sm:$0xf]
    %v789 = vld [vmem:[%s777 + $0x2c] sm:$0xf]
    %v790 = vld [vmem:[%s777 + $0x30] sm:$0xf]
    %v791 = vld [vmem:[%s777 + $0x34] sm:$0xf]
    %v792 = vld [vmem:[%s777 + $0x38] sm:$0xf]
    %v793 = vld [vmem:[%s777 + $0x3c] sm:$0xf]
    %v810 = vunpack.c.l.b16 %v778
    %v811 = vunpack.c.l.b16 %v779
    %v812 = vunpack.c.l.b16 %v780
    %v813 = vunpack.c.l.b16 %v781
    %v814 = vunpack.c.l.b16 %v782
    %v815 = vunpack.c.l.b16 %v783
    %v816 = vunpack.c.l.b16 %v784
    %v817 = vunpack.c.l.b16 %v785
    %v818 = vunpack.c.l.b16 %v786
    %v819 = vunpack.c.l.b16 %v787
    %v820 = vunpack.c.l.b16 %v788
    %v821 = vunpack.c.l.b16 %v789
    %v822 = vunpack.c.l.b16 %v790
    %v823 = vunpack.c.l.b16 %v791
    %v824 = vunpack.c.l.b16 %v792
    %v825 = vunpack.c.l.b16 %v793
    %v826 = vpack.c.b16 %v811, %v810
    %v827 = vpack.c.b16 %v813, %v812
    %v828 = vpack.c.b16 %v815, %v814
    %v829 = vpack.c.b16 %v817, %v816
    %v830 = vpack.c.b16 %v819, %v818
    %v831 = vpack.c.b16 %v821, %v820
    %v832 = vpack.c.b16 %v823, %v822
    %v833 = vpack.c.b16 %v825, %v824
    %842 = vmatprep.subr.bf16.mxu0 0
    %843 = vmatpush1.bf16.msra.mxu0 %v833
    %844 = vmatprep.subr.bf16.mxu0 0
    %845 = vmatpush1.bf16.msra.mxu0 %v832
    %846 = vmatprep.subr.bf16.mxu0 0
    %847 = vmatpush1.bf16.msra.mxu0 %v831
    %848 = vmatprep.subr.bf16.mxu0 0
    %849 = vmatpush1.bf16.msra.mxu0 %v830
    %850 = vmatprep.subr.bf16.mxu0 0
    %851 = vmatpush1.bf16.msra.mxu0 %v829
    %852 = vmatprep.subr.bf16.mxu0 0
    %853 = vmatpush1.bf16.msra.mxu0 %v828
    %854 = vmatprep.subr.bf16.mxu0 0
    %855 = vmatpush1.bf16.msra.mxu0 %v827
    %856 = vmatprep.subr.bf16.mxu0 0
    %857 = vmatpush1.bf16.msra.mxu0 %v826
    %858 = vmatprep.subr.bf16.mxu0 0
    %859 = vmatpush2.bf16.msra.mxu0 0
    %860 = vmatprep.subr.bf16.mxu0 0
    %861 = vmatpush2.bf16.msra.mxu0 0
    %862 = vmatprep.subr.bf16.mxu0 0
    %863 = vmatpush2.bf16.msra.mxu0 0
    %864 = vmatprep.subr.bf16.mxu0 0
    %865 = vmatpush2.bf16.msra.mxu0 0
    %866 = vmatprep.subr.bf16.mxu0 0
    %867 = vmatpush2.bf16.msra.mxu0 0
    %868 = vmatprep.subr.bf16.mxu0 0
    %869 = vmatpush2.bf16.msra.mxu0 0
    %870 = vmatprep.subr.bf16.mxu0 0
    %871 = vmatpush2.bf16.msra.mxu0 0
    %872 = vmatprep.subr.bf16.mxu0 0
    %873 = vmatpush2.bf16.msra.mxu0 0
    %874 = vmatprep.mubr.bf16.mxu0 0
    %875 = vmatmul.mubr.bf16.gmra.mxu0 %v772
    %v876 = vpop.f32.mrf.mxu0
    %v877 = vadd.f32 0.0, %v876
    %v878 = vpop.f32.mrf.mxu0
    %v879 = vpop.f32.mrf.mxu0
    %v880 = vadd.f32 0.0, %v879
    %v881 = vpop.f32.mrf.mxu0
    %882 = vmatprep.mubr.bf16.mxu0 0
    %883 = vmatmul.mubr.bf16.gmra.mxu0 %v773
    %v884 = vpop.f32.mrf.mxu0
    %v885 = vadd.f32 0.0, %v884
    %v886 = vpop.f32.mrf.mxu0
    %v887 = vpop.f32.mrf.mxu0
    %v888 = vpop.f32.mrf.mxu0
    %889 = vdwg.mxu0
    %s890 = scalar_lea.vmem [#allocation7], 192
    %v891 = vld [vmem:[%s890] sm:$0xf]
    %v892 = vld [vmem:[%s890 + $0x4] sm:$0xf]
    %v893 = vld [vmem:[%s890 + $0x8] sm:$0xf]
    %v894 = vld [vmem:[%s890 + $0xc] sm:$0xf]
    %v895 = vld [vmem:[%s890 + $0x10] sm:$0xf]
    %v896 = vld [vmem:[%s890 + $0x14] sm:$0xf]
    %v897 = vld [vmem:[%s890 + $0x18] sm:$0xf]
    %v898 = vld [vmem:[%s890 + $0x1c] sm:$0xf]
    %v899 = vld [vmem:[%s890 + $0x20] sm:$0xf]
    %v900 = vld [vmem:[%s890 + $0x24] sm:$0xf]
    %v901 = vld [vmem:[%s890 + $0x28] sm:$0xf]
    %v902 = vld [vmem:[%s890 + $0x2c] sm:$0xf]
    %v903 = vld [vmem:[%s890 + $0x30] sm:$0xf]
    %v904 = vld [vmem:[%s890 + $0x34] sm:$0xf]
    %v905 = vld [vmem:[%s890 + $0x38] sm:$0xf]
    %v906 = vld [vmem:[%s890 + $0x3c] sm:$0xf]
    %v923 = vunpack.c.l.b16 %v891
    %v924 = vunpack.c.l.b16 %v892
    %v925 = vunpack.c.l.b16 %v893
    %v926 = vunpack.c.l.b16 %v894
    %v927 = vunpack.c.l.b16 %v895
    %v928 = vunpack.c.l.b16 %v896
    %v929 = vunpack.c.l.b16 %v897
    %v930 = vunpack.c.l.b16 %v898
    %v931 = vunpack.c.l.b16 %v899
    %v932 = vunpack.c.l.b16 %v900
    %v933 = vunpack.c.l.b16 %v901
    %v934 = vunpack.c.l.b16 %v902
    %v935 = vunpack.c.l.b16 %v903
    %v936 = vunpack.c.l.b16 %v904
    %v937 = vunpack.c.l.b16 %v905
    %v938 = vunpack.c.l.b16 %v906
    %v939 = vpack.c.b16 %v924, %v923
    %v940 = vpack.c.b16 %v926, %v925
    %v941 = vpack.c.b16 %v928, %v927
    %v942 = vpack.c.b16 %v930, %v929
    %v943 = vpack.c.b16 %v932, %v931
    %v944 = vpack.c.b16 %v934, %v933
    %v945 = vpack.c.b16 %v936, %v935
    %v946 = vpack.c.b16 %v938, %v937
    %955 = vmatprep.subr.bf16.mxu0 0
    %956 = vmatpush1.bf16.msra.mxu0 %v946
    %957 = vmatprep.subr.bf16.mxu0 0
    %958 = vmatpush1.bf16.msra.mxu0 %v945
    %959 = vmatprep.subr.bf16.mxu0 0
    %960 = vmatpush1.bf16.msra.mxu0 %v944
    %961 = vmatprep.subr.bf16.mxu0 0
    %962 = vmatpush1.bf16.msra.mxu0 %v943
    %963 = vmatprep.subr.bf16.mxu0 0
    %964 = vmatpush1.bf16.msra.mxu0 %v942
    %965 = vmatprep.subr.bf16.mxu0 0
    %966 = vmatpush1.bf16.msra.mxu0 %v941
    %967 = vmatprep.subr.bf16.mxu0 0
    %968 = vmatpush1.bf16.msra.mxu0 %v940
    %969 = vmatprep.subr.bf16.mxu0 0
    %970 = vmatpush1.bf16.msra.mxu0 %v939
    %971 = vmatprep.subr.bf16.mxu0 0
    %972 = vmatpush2.bf16.msra.mxu0 0
    %973 = vmatprep.subr.bf16.mxu0 0
    %974 = vmatpush2.bf16.msra.mxu0 0
    %975 = vmatprep.subr.bf16.mxu0 0
    %976 = vmatpush2.bf16.msra.mxu0 0
    %977 = vmatprep.subr.bf16.mxu0 0
    %978 = vmatpush2.bf16.msra.mxu0 0
    %979 = vmatprep.subr.bf16.mxu0 0
    %980 = vmatpush2.bf16.msra.mxu0 0
    %981 = vmatprep.subr.bf16.mxu0 0
    %982 = vmatpush2.bf16.msra.mxu0 0
    %983 = vmatprep.subr.bf16.mxu0 0
    %984 = vmatpush2.bf16.msra.mxu0 0
    %985 = vmatprep.subr.bf16.mxu0 0
    %986 = vmatpush2.bf16.msra.mxu0 0
    %987 = vmatprep.mubr.bf16.mxu0 0
    %988 = vmatmul.mubr.bf16.gmra.mxu0 %v774
    %v989 = vpop.f32.mrf.mxu0
    %v990 = vadd.f32 0.0, %v989
    %v991 = vpop.f32.mrf.mxu0
    %v992 = vpop.f32.mrf.mxu0
    %v993 = vadd.f32 0.0, %v992
    %v994 = vpop.f32.mrf.mxu0
    %995 = vmatprep.mubr.bf16.mxu0 0
    %996 = vmatmul.mubr.bf16.gmra.mxu0 %v775
    %v997 = vpop.f32.mrf.mxu0
    %v998 = vadd.f32 0.0, %v997
    %v999 = vpop.f32.mrf.mxu0
    %v1000 = vpop.f32.mrf.mxu0
    %v1001 = vadd.f32 0.0, %v1000
    %v1002 = vpop.f32.mrf.mxu0
    %1003 = vmatprep.mubr.bf16.mxu0 0
    %1004 = vmatmul.mubr.bf16.gmra.mxu0 %v776
    %v1005 = vpop.f32.mrf.mxu0
    %v1006 = vadd.f32 0.0, %v1005
    %v1007 = vpop.f32.mrf.mxu0
    %v1008 = vpop.f32.mrf.mxu0
    %v1009 = vpop.f32.mrf.mxu0
    %1010 = vdwg.mxu0
    %v1011 = vpack.c.bf16 %v880, %v877
    %v1012 = vpack.c.bf16 %v885, %v885
    %s1013 = scalar_lea.vmem [#allocation8], 128
    %v1014 = vld [vmem:[%s1013] sm:$0xf]
    %v1015 = vld [vmem:[%s1013 + $0x4] sm:$0xf]
    %v1016 = vld [vmem:[%s1013 + $0x8] sm:$0xf]
    %v1017 = vld [vmem:[%s1013 + $0xc] sm:$0xf]
    %v1018 = vld [vmem:[%s1013 + $0x10] sm:$0xf]
    %v1019 = vld [vmem:[%s1013 + $0x14] sm:$0xf]
    %v1020 = vld [vmem:[%s1013 + $0x18] sm:$0xf]
    %v1021 = vld [vmem:[%s1013 + $0x1c] sm:$0xf]
    %v1022 = vld [vmem:[%s1013 + $0x20] sm:$0xf]
    %v1023 = vld [vmem:[%s1013 + $0x24] sm:$0xf]
    %v1024 = vld [vmem:[%s1013 + $0x28] sm:$0xf]
    %v1025 = vld [vmem:[%s1013 + $0x2c] sm:$0xf]
    %v1026 = vld [vmem:[%s1013 + $0x30] sm:$0xf]
    %v1027 = vld [vmem:[%s1013 + $0x34] sm:$0xf]
    %v1028 = vld [vmem:[%s1013 + $0x38] sm:$0xf]
    %v1029 = vld [vmem:[%s1013 + $0x3c] sm:$0xf]
    %v1046 = vunpack.c.l.b16 %v1014
    %v1047 = vunpack.c.l.b16 %v1015
    %v1048 = vunpack.c.l.b16 %v1016
    %v1049 = vunpack.c.l.b16 %v1017
    %v1050 = vunpack.c.l.b16 %v1018
    %v1051 = vunpack.c.l.b16 %v1019
    %v1052 = vunpack.c.l.b16 %v1020
    %v1053 = vunpack.c.l.b16 %v1021
    %v1054 = vunpack.c.l.b16 %v1022
    %v1055 = vunpack.c.l.b16 %v1023
    %v1056 = vunpack.c.l.b16 %v1024
    %v1057 = vunpack.c.l.b16 %v1025
    %v1058 = vunpack.c.l.b16 %v1026
    %v1059 = vunpack.c.l.b16 %v1027
    %v1060 = vunpack.c.l.b16 %v1028
    %v1061 = vunpack.c.l.b16 %v1029
    %v1062 = vpack.c.b16 %v1047, %v1046
    %v1063 = vpack.c.b16 %v1049, %v1048
    %v1064 = vpack.c.b16 %v1051, %v1050
    %v1065 = vpack.c.b16 %v1053, %v1052
    %v1066 = vpack.c.b16 %v1055, %v1054
    %v1067 = vpack.c.b16 %v1057, %v1056
    %v1068 = vpack.c.b16 %v1059, %v1058
    %v1069 = vpack.c.b16 %v1061, %v1060
    %1078 = vmatprep.subr.bf16.mxu0 0
    %1079 = vmatpush1.bf16.msra.mxu0 %v1069
    %1080 = vmatprep.subr.bf16.mxu0 0
    %1081 = vmatpush1.bf16.msra.mxu0 %v1068
    %1082 = vmatprep.subr.bf16.mxu0 0
    %1083 = vmatpush1.bf16.msra.mxu0 %v1067
    %1084 = vmatprep.subr.bf16.mxu0 0
    %1085 = vmatpush1.bf16.msra.mxu0 %v1066
    %1086 = vmatprep.subr.bf16.mxu0 0
    %1087 = vmatpush1.bf16.msra.mxu0 %v1065
    %1088 = vmatprep.subr.bf16.mxu0 0
    %1089 = vmatpush1.bf16.msra.mxu0 %v1064
    %1090 = vmatprep.subr.bf16.mxu0 0
    %1091 = vmatpush1.bf16.msra.mxu0 %v1063
    %1092 = vmatprep.subr.bf16.mxu0 0
    %1093 = vmatpush1.bf16.msra.mxu0 %v1062
    %1094 = vmatprep.subr.bf16.mxu0 0
    %1095 = vmatpush2.bf16.msra.mxu0 0
    %1096 = vmatprep.subr.bf16.mxu0 0
    %1097 = vmatpush2.bf16.msra.mxu0 0
    %1098 = vmatprep.subr.bf16.mxu0 0
    %1099 = vmatpush2.bf16.msra.mxu0 0
    %1100 = vmatprep.subr.bf16.mxu0 0
    %1101 = vmatpush2.bf16.msra.mxu0 0
    %1102 = vmatprep.subr.bf16.mxu0 0
    %1103 = vmatpush2.bf16.msra.mxu0 0
    %1104 = vmatprep.subr.bf16.mxu0 0
    %1105 = vmatpush2.bf16.msra.mxu0 0
    %1106 = vmatprep.subr.bf16.mxu0 0
    %1107 = vmatpush2.bf16.msra.mxu0 0
    %1108 = vmatprep.subr.bf16.mxu0 0
    %1109 = vmatpush2.bf16.msra.mxu0 0
    %1110 = vmatprep.mubr.bf16.mxu0 0
    %1111 = vmatmul.mubr.bf16.gmra.mxu0 %v774
    %v1112 = vpop.f32.mrf.mxu0
    %v1113 = vadd.f32 0.0, %v1112
    %v1114 = vpop.f32.mrf.mxu0
    %v1115 = vpop.f32.mrf.mxu0
    %v1116 = vadd.f32 0.0, %v1115
    %v1117 = vpop.f32.mrf.mxu0
    %1118 = vmatprep.mubr.bf16.mxu0 0
    %1119 = vmatmul.mubr.bf16.gmra.mxu0 %v775
    %v1120 = vpop.f32.mrf.mxu0
    %v1121 = vadd.f32 0.0, %v1120
    %v1122 = vpop.f32.mrf.mxu0
    %v1123 = vpop.f32.mrf.mxu0
    %v1124 = vadd.f32 0.0, %v1123
    %v1125 = vpop.f32.mrf.mxu0
    %1126 = vmatprep.mubr.bf16.mxu0 0
    %1127 = vmatmul.mubr.bf16.gmra.mxu0 %v776
    %v1128 = vpop.f32.mrf.mxu0
    %v1129 = vadd.f32 0.0, %v1128
    %v1130 = vpop.f32.mrf.mxu0
    %v1131 = vpop.f32.mrf.mxu0
    %v1132 = vpop.f32.mrf.mxu0
    %1133 = vdwg.mxu0
    %v1135 = vsel %vm504, %v1012, 0
    %1137 = vmatprep.subr.bf16.mxu0 0
    %1138 = vmatpush1.bf16.msra.mxu0 0
    %1139 = vmatprep.subr.bf16.mxu0 0
    %1140 = vmatpush1.bf16.msra.mxu0 0
    %1141 = vmatprep.subr.bf16.mxu0 0
    %1142 = vmatpush1.bf16.msra.mxu0 0
    %1143 = vmatprep.subr.bf16.mxu0 0
    %1144 = vmatpush1.bf16.msra.mxu0 0
    %1145 = vmatprep.subr.bf16.mxu0 0
    %1146 = vmatpush1.bf16.msra.mxu0 0
    %1147 = vmatprep.subr.bf16.mxu0 0
    %1148 = vmatpush1.bf16.msra.mxu0 0
    %1149 = vmatprep.subr.bf16.mxu0 0
    %1150 = vmatpush1.bf16.msra.mxu0 %v1135
    %1151 = vmatprep.subr.bf16.mxu0 0
    %1152 = vmatpush1.bf16.msra.mxu0 %v1011
    %1153 = vmatprep.subr.bf16.mxu0 0
    %1154 = vmatpush2.bf16.msra.mxu0 0
    %1155 = vmatprep.subr.bf16.mxu0 0
    %1156 = vmatpush2.bf16.msra.mxu0 0
    %1157 = vmatprep.subr.bf16.mxu0 0
    %1158 = vmatpush2.bf16.msra.mxu0 0
    %1159 = vmatprep.subr.bf16.mxu0 0
    %1160 = vmatpush2.bf16.msra.mxu0 0
    %1161 = vmatprep.subr.bf16.mxu0 0
    %1162 = vmatpush2.bf16.msra.mxu0 0
    %1163 = vmatprep.subr.bf16.mxu0 0
    %1164 = vmatpush2.bf16.msra.mxu0 0
    %1165 = vmatprep.subr.bf16.mxu0 0
    %1166 = vmatpush2.bf16.msra.mxu0 0
    %1167 = vmatprep.subr.bf16.mxu0 0
    %1168 = vmatpush2.bf16.msra.mxu0 0
    %1169 = vmatprep.mubr.bf16.mxu0 0
    %1170 = vmatmul.mubr.bf16.gmra.mxu0 %v496
    %v1171 = vpop.f32.mrf.mxu0
    %v1172 = vadd.f32 %v1113, %v1171
    %v1173 = vpop.f32.mrf.mxu0
    %v1174 = vpop.f32.mrf.mxu0
    %v1175 = vadd.f32 %v1116, %v1174
    %v1176 = vpop.f32.mrf.mxu0
    %1177 = vmatprep.mubr.bf16.mxu0 0
    %1178 = vmatmul.mubr.bf16.gmra.mxu0 %v499
    %v1179 = vpop.f32.mrf.mxu0
    %v1180 = vadd.f32 %v1121, %v1179
    %v1181 = vpop.f32.mrf.mxu0
    %v1182 = vpop.f32.mrf.mxu0
    %v1183 = vadd.f32 %v1124, %v1182
    %v1184 = vpop.f32.mrf.mxu0
    %1185 = vmatprep.mubr.bf16.mxu0 0
    %1186 = vmatmul.mubr.bf16.gmra.mxu0 %v502
    %v1187 = vpop.f32.mrf.mxu0
    %v1188 = vadd.f32 %v1129, %v1187
    %v1189 = vpop.f32.mrf.mxu0
    %v1190 = vpop.f32.mrf.mxu0
    %v1191 = vpop.f32.mrf.mxu0
    %1192 = vdwg.mxu0
    %v1193 = vld [vmem:[%s6 + $0x2] sm:$0x1]
    %v1194 = vlaneseq
    %v1195 = vshrl.u32 %v1194, 7
    %v1196 = vsub.s32 0, %v1195
    %v1197 = vrot.slane %v1193, %v1196
    %v1198 = vadd.f32 %v1172, %v1197
    %v1199 = vadd.f32 %v1175, %v1197
    %v1200 = vadd.f32 %v1180, %v1197
    %v1201 = vadd.f32 %v1183, %v1197
    %v1202 = vadd.f32 %v1188, %v1197
    %v1203 = vpack.c.bf16 %v993, %v990
    %v1204 = vpack.c.bf16 %v1001, %v998
    %v1205 = vpack.c.bf16 %v1006, %v1006
    %s1206 = scalar_lea.vmem [#allocation8], 192
    %v1207 = vld [vmem:[%s1206] sm:$0xf]
    %v1208 = vld [vmem:[%s1206 + $0x4] sm:$0xf]
    %v1209 = vld [vmem:[%s1206 + $0x8] sm:$0xf]
    %v1210 = vld [vmem:[%s1206 + $0xc] sm:$0xf]
    %v1211 = vld [vmem:[%s1206 + $0x10] sm:$0xf]
    %v1212 = vld [vmem:[%s1206 + $0x14] sm:$0xf]
    %v1213 = vld [vmem:[%s1206 + $0x18] sm:$0xf]
    %v1214 = vld [vmem:[%s1206 + $0x1c] sm:$0xf]
    %v1215 = vld [vmem:[%s1206 + $0x20] sm:$0xf]
    %v1216 = vld [vmem:[%s1206 + $0x24] sm:$0xf]
    %v1217 = vld [vmem:[%s1206 + $0x28] sm:$0xf]
    %v1218 = vld [vmem:[%s1206 + $0x2c] sm:$0xf]
    %v1219 = vld [vmem:[%s1206 + $0x30] sm:$0xf]
    %v1220 = vld [vmem:[%s1206 + $0x34] sm:$0xf]
    %v1221 = vld [vmem:[%s1206 + $0x38] sm:$0xf]
    %v1222 = vld [vmem:[%s1206 + $0x3c] sm:$0xf]
    %v1239 = vunpack.c.l.b16 %v1207
    %v1240 = vunpack.c.l.b16 %v1208
    %v1241 = vunpack.c.l.b16 %v1209
    %v1242 = vunpack.c.l.b16 %v1210
    %v1243 = vunpack.c.l.b16 %v1211
    %v1244 = vunpack.c.l.b16 %v1212
    %v1245 = vunpack.c.l.b16 %v1213
    %v1246 = vunpack.c.l.b16 %v1214
    %v1247 = vunpack.c.l.b16 %v1215
    %v1248 = vunpack.c.l.b16 %v1216
    %v1249 = vunpack.c.l.b16 %v1217
    %v1250 = vunpack.c.l.b16 %v1218
    %v1251 = vunpack.c.l.b16 %v1219
    %v1252 = vunpack.c.l.b16 %v1220
    %v1253 = vunpack.c.l.b16 %v1221
    %v1254 = vunpack.c.l.b16 %v1222
    %v1255 = vpack.c.b16 %v1240, %v1239
    %v1256 = vpack.c.b16 %v1242, %v1241
    %v1257 = vpack.c.b16 %v1244, %v1243
    %v1258 = vpack.c.b16 %v1246, %v1245
    %v1259 = vpack.c.b16 %v1248, %v1247
    %v1260 = vpack.c.b16 %v1250, %v1249
    %v1261 = vpack.c.b16 %v1252, %v1251
    %v1262 = vpack.c.b16 %v1254, %v1253
    %1271 = vmatprep.subr.bf16.mxu0 0
    %1272 = vmatpush1.bf16.msra.mxu0 %v1262
    %1273 = vmatprep.subr.bf16.mxu0 0
    %1274 = vmatpush1.bf16.msra.mxu0 %v1261
    %1275 = vmatprep.subr.bf16.mxu0 0
    %1276 = vmatpush1.bf16.msra.mxu0 %v1260
    %1277 = vmatprep.subr.bf16.mxu0 0
    %1278 = vmatpush1.bf16.msra.mxu0 %v1259
    %1279 = vmatprep.subr.bf16.mxu0 0
    %1280 = vmatpush1.bf16.msra.mxu0 %v1258
    %1281 = vmatprep.subr.bf16.mxu0 0
    %1282 = vmatpush1.bf16.msra.mxu0 %v1257
    %1283 = vmatprep.subr.bf16.mxu0 0
    %1284 = vmatpush1.bf16.msra.mxu0 %v1256
    %1285 = vmatprep.subr.bf16.mxu0 0
    %1286 = vmatpush1.bf16.msra.mxu0 %v1255
    %1287 = vmatprep.subr.bf16.mxu0 0
    %1288 = vmatpush2.bf16.msra.mxu0 0
    %1289 = vmatprep.subr.bf16.mxu0 0
    %1290 = vmatpush2.bf16.msra.mxu0 0
    %1291 = vmatprep.subr.bf16.mxu0 0
    %1292 = vmatpush2.bf16.msra.mxu0 0
    %1293 = vmatprep.subr.bf16.mxu0 0
    %1294 = vmatpush2.bf16.msra.mxu0 0
    %1295 = vmatprep.subr.bf16.mxu0 0
    %1296 = vmatpush2.bf16.msra.mxu0 0
    %1297 = vmatprep.subr.bf16.mxu0 0
    %1298 = vmatpush2.bf16.msra.mxu0 0
    %1299 = vmatprep.subr.bf16.mxu0 0
    %1300 = vmatpush2.bf16.msra.mxu0 0
    %1301 = vmatprep.subr.bf16.mxu0 0
    %1302 = vmatpush2.bf16.msra.mxu0 0
    %1303 = vmatprep.mubr.bf16.mxu0 0
    %1304 = vmatmul.mubr.bf16.gmra.mxu0 %v772
    %v1305 = vpop.f32.mrf.mxu0
    %v1306 = vadd.f32 0.0, %v1305
    %v1307 = vpop.f32.mrf.mxu0
    %v1308 = vpop.f32.mrf.mxu0
    %v1309 = vadd.f32 0.0, %v1308
    %v1310 = vpop.f32.mrf.mxu0
    %1311 = vmatprep.mubr.bf16.mxu0 0
    %1312 = vmatmul.mubr.bf16.gmra.mxu0 %v773
    %v1313 = vpop.f32.mrf.mxu0
    %v1314 = vadd.f32 0.0, %v1313
    %v1315 = vpop.f32.mrf.mxu0
    %v1316 = vpop.f32.mrf.mxu0
    %v1317 = vpop.f32.mrf.mxu0
    %1318 = vdwg.mxu0
    %v1320 = vsel %vm504, %v1205, 0
    %1322 = vmatprep.subr.bf16.mxu0 0
    %1323 = vmatpush1.bf16.msra.mxu0 0
    %1324 = vmatprep.subr.bf16.mxu0 0
    %1325 = vmatpush1.bf16.msra.mxu0 0
    %1326 = vmatprep.subr.bf16.mxu0 0
    %1327 = vmatpush1.bf16.msra.mxu0 0
    %1328 = vmatprep.subr.bf16.mxu0 0
    %1329 = vmatpush1.bf16.msra.mxu0 0
    %1330 = vmatprep.subr.bf16.mxu0 0
    %1331 = vmatpush1.bf16.msra.mxu0 0
    %1332 = vmatprep.subr.bf16.mxu0 0
    %1333 = vmatpush1.bf16.msra.mxu0 %v1320
    %1334 = vmatprep.subr.bf16.mxu0 0
    %1335 = vmatpush1.bf16.msra.mxu0 %v1204
    %1336 = vmatprep.subr.bf16.mxu0 0
    %1337 = vmatpush1.bf16.msra.mxu0 %v1203
    %1338 = vmatprep.subr.bf16.mxu0 0
    %1339 = vmatpush2.bf16.msra.mxu0 0
    %1340 = vmatprep.subr.bf16.mxu0 0
    %1341 = vmatpush2.bf16.msra.mxu0 0
    %1342 = vmatprep.subr.bf16.mxu0 0
    %1343 = vmatpush2.bf16.msra.mxu0 0
    %1344 = vmatprep.subr.bf16.mxu0 0
    %1345 = vmatpush2.bf16.msra.mxu0 0
    %1346 = vmatprep.subr.bf16.mxu0 0
    %1347 = vmatpush2.bf16.msra.mxu0 0
    %1348 = vmatprep.subr.bf16.mxu0 0
    %1349 = vmatpush2.bf16.msra.mxu0 0
    %1350 = vmatprep.subr.bf16.mxu0 0
    %1351 = vmatpush2.bf16.msra.mxu0 0
    %1352 = vmatprep.subr.bf16.mxu0 0
    %1353 = vmatpush2.bf16.msra.mxu0 0
    %1354 = vmatprep.mubr.bf16.mxu0 0
    %1355 = vmatmul.mubr.bf16.gmra.mxu0 %v700
    %v1356 = vpop.f32.mrf.mxu0
    %v1357 = vadd.f32 %v1306, %v1356
    %v1358 = vpop.f32.mrf.mxu0
    %v1359 = vpop.f32.mrf.mxu0
    %v1360 = vadd.f32 %v1309, %v1359
    %v1361 = vpop.f32.mrf.mxu0
    %1362 = vmatprep.mubr.bf16.mxu0 0
    %1363 = vmatmul.mubr.bf16.gmra.mxu0 %v703
    %v1364 = vpop.f32.mrf.mxu0
    %v1365 = vadd.f32 %v1314, %v1364
    %v1366 = vpop.f32.mrf.mxu0
    %v1367 = vpop.f32.mrf.mxu0
    %v1368 = vpop.f32.mrf.mxu0
    %1369 = vdwg.mxu0
    %v1370 = vld [vmem:[%s6 + $0x3] sm:$0x1]
    %v1371 = vlaneseq
    %v1372 = vshrl.u32 %v1371, 7
    %v1373 = vsub.s32 0, %v1372
    %v1374 = vrot.slane %v1370, %v1373
    %v1375 = vadd.f32 %v1357, %v1374
    %v1376 = vadd.f32 %v1360, %v1374
    %v1377 = vadd.f32 %v1365, %v1374
    %v1378 = vmax.f32 %v1375, 0.0
    %v1379 = vmax.f32 %v1376, 0.0
    %v1380 = vmax.f32 %v1377, 0.0
    %v1381 = vmax.f32 %v1198, 0.0
    %v1382 = vmax.f32 %v1199, 0.0
    %v1383 = vmax.f32 %v1200, 0.0
    %v1384 = vmax.f32 %v1201, 0.0
    %v1385 = vmax.f32 %v1202, 0.0
    %v1386 = vpack.c.bf16 %v1379, %v1378
    %v1387 = vpack.c.bf16 %v1380, %v1380
    %v1388 = vpack.c.bf16 %v1382, %v1381
    %v1389 = vpack.c.bf16 %v1384, %v1383
    %v1390 = vpack.c.bf16 %v1385, %v1385
    %s1391 = scalar_lea.vmem [#allocation7], 256
    %v1392 = vld [vmem:[%s1391] sm:$0xf]
    %v1393 = vld [vmem:[%s1391 + $0x4] sm:$0xf]
    %v1394 = vld [vmem:[%s1391 + $0x8] sm:$0xf]
    %v1395 = vld [vmem:[%s1391 + $0xc] sm:$0xf]
    %v1396 = vld [vmem:[%s1391 + $0x10] sm:$0xf]
    %v1397 = vld [vmem:[%s1391 + $0x14] sm:$0xf]
    %v1398 = vld [vmem:[%s1391 + $0x18] sm:$0xf]
    %v1399 = vld [vmem:[%s1391 + $0x1c] sm:$0xf]
    %v1400 = vld [vmem:[%s1391 + $0x20] sm:$0xf]
    %v1401 = vld [vmem:[%s1391 + $0x24] sm:$0xf]
    %v1402 = vld [vmem:[%s1391 + $0x28] sm:$0xf]
    %v1403 = vld [vmem:[%s1391 + $0x2c] sm:$0xf]
    %v1404 = vld [vmem:[%s1391 + $0x30] sm:$0xf]
    %v1405 = vld [vmem:[%s1391 + $0x34] sm:$0xf]
    %v1406 = vld [vmem:[%s1391 + $0x38] sm:$0xf]
    %v1407 = vld [vmem:[%s1391 + $0x3c] sm:$0xf]
    %v1424 = vunpack.c.l.b16 %v1392
    %v1425 = vunpack.c.l.b16 %v1393
    %v1426 = vunpack.c.l.b16 %v1394
    %v1427 = vunpack.c.l.b16 %v1395
    %v1428 = vunpack.c.l.b16 %v1396
    %v1429 = vunpack.c.l.b16 %v1397
    %v1430 = vunpack.c.l.b16 %v1398
    %v1431 = vunpack.c.l.b16 %v1399
    %v1432 = vunpack.c.l.b16 %v1400
    %v1433 = vunpack.c.l.b16 %v1401
    %v1434 = vunpack.c.l.b16 %v1402
    %v1435 = vunpack.c.l.b16 %v1403
    %v1436 = vunpack.c.l.b16 %v1404
    %v1437 = vunpack.c.l.b16 %v1405
    %v1438 = vunpack.c.l.b16 %v1406
    %v1439 = vunpack.c.l.b16 %v1407
    %v1440 = vpack.c.b16 %v1425, %v1424
    %v1441 = vpack.c.b16 %v1427, %v1426
    %v1442 = vpack.c.b16 %v1429, %v1428
    %v1443 = vpack.c.b16 %v1431, %v1430
    %v1444 = vpack.c.b16 %v1433, %v1432
    %v1445 = vpack.c.b16 %v1435, %v1434
    %v1446 = vpack.c.b16 %v1437, %v1436
    %v1447 = vpack.c.b16 %v1439, %v1438
    %1456 = vmatprep.subr.bf16.mxu0 0
    %1457 = vmatpush1.bf16.msra.mxu0 %v1447
    %1458 = vmatprep.subr.bf16.mxu0 0
    %1459 = vmatpush1.bf16.msra.mxu0 %v1446
    %1460 = vmatprep.subr.bf16.mxu0 0
    %1461 = vmatpush1.bf16.msra.mxu0 %v1445
    %1462 = vmatprep.subr.bf16.mxu0 0
    %1463 = vmatpush1.bf16.msra.mxu0 %v1444
    %1464 = vmatprep.subr.bf16.mxu0 0
    %1465 = vmatpush1.bf16.msra.mxu0 %v1443
    %1466 = vmatprep.subr.bf16.mxu0 0
    %1467 = vmatpush1.bf16.msra.mxu0 %v1442
    %1468 = vmatprep.subr.bf16.mxu0 0
    %1469 = vmatpush1.bf16.msra.mxu0 %v1441
    %1470 = vmatprep.subr.bf16.mxu0 0
    %1471 = vmatpush1.bf16.msra.mxu0 %v1440
    %1472 = vmatprep.subr.bf16.mxu0 0
    %1473 = vmatpush2.bf16.msra.mxu0 0
    %1474 = vmatprep.subr.bf16.mxu0 0
    %1475 = vmatpush2.bf16.msra.mxu0 0
    %1476 = vmatprep.subr.bf16.mxu0 0
    %1477 = vmatpush2.bf16.msra.mxu0 0
    %1478 = vmatprep.subr.bf16.mxu0 0
    %1479 = vmatpush2.bf16.msra.mxu0 0
    %1480 = vmatprep.subr.bf16.mxu0 0
    %1481 = vmatpush2.bf16.msra.mxu0 0
    %1482 = vmatprep.subr.bf16.mxu0 0
    %1483 = vmatpush2.bf16.msra.mxu0 0
    %1484 = vmatprep.subr.bf16.mxu0 0
    %1485 = vmatpush2.bf16.msra.mxu0 0
    %1486 = vmatprep.subr.bf16.mxu0 0
    %1487 = vmatpush2.bf16.msra.mxu0 0
    %1488 = vmatprep.mubr.bf16.mxu0 0
    %1489 = vmatmul.mubr.bf16.gmra.mxu0 %v1386
    %v1490 = vpop.f32.mrf.mxu0
    %v1491 = vadd.f32 0.0, %v1490
    %v1492 = vpop.f32.mrf.mxu0
    %v1493 = vpop.f32.mrf.mxu0
    %v1494 = vadd.f32 0.0, %v1493
    %v1495 = vpop.f32.mrf.mxu0
    %1496 = vmatprep.mubr.bf16.mxu0 0
    %1497 = vmatmul.mubr.bf16.gmra.mxu0 %v1387
    %v1498 = vpop.f32.mrf.mxu0
    %v1499 = vadd.f32 0.0, %v1498
    %v1500 = vpop.f32.mrf.mxu0
    %v1501 = vpop.f32.mrf.mxu0
    %v1502 = vpop.f32.mrf.mxu0
    %1503 = vdwg.mxu0
    %s1504 = scalar_lea.vmem [#allocation7], 320
    %v1505 = vld [vmem:[%s1504] sm:$0xf]
    %v1506 = vld [vmem:[%s1504 + $0x4] sm:$0xf]
    %v1507 = vld [vmem:[%s1504 + $0x8] sm:$0xf]
    %v1508 = vld [vmem:[%s1504 + $0xc] sm:$0xf]
    %v1509 = vld [vmem:[%s1504 + $0x10] sm:$0xf]
    %v1510 = vld [vmem:[%s1504 + $0x14] sm:$0xf]
    %v1511 = vld [vmem:[%s1504 + $0x18] sm:$0xf]
    %v1512 = vld [vmem:[%s1504 + $0x1c] sm:$0xf]
    %v1513 = vld [vmem:[%s1504 + $0x20] sm:$0xf]
    %v1514 = vld [vmem:[%s1504 + $0x24] sm:$0xf]
    %v1515 = vld [vmem:[%s1504 + $0x28] sm:$0xf]
    %v1516 = vld [vmem:[%s1504 + $0x2c] sm:$0xf]
    %v1517 = vld [vmem:[%s1504 + $0x30] sm:$0xf]
    %v1518 = vld [vmem:[%s1504 + $0x34] sm:$0xf]
    %v1519 = vld [vmem:[%s1504 + $0x38] sm:$0xf]
    %v1520 = vld [vmem:[%s1504 + $0x3c] sm:$0xf]
    %v1537 = vunpack.c.l.b16 %v1505
    %v1538 = vunpack.c.l.b16 %v1506
    %v1539 = vunpack.c.l.b16 %v1507
    %v1540 = vunpack.c.l.b16 %v1508
    %v1541 = vunpack.c.l.b16 %v1509
    %v1542 = vunpack.c.l.b16 %v1510
    %v1543 = vunpack.c.l.b16 %v1511
    %v1544 = vunpack.c.l.b16 %v1512
    %v1545 = vunpack.c.l.b16 %v1513
    %v1546 = vunpack.c.l.b16 %v1514
    %v1547 = vunpack.c.l.b16 %v1515
    %v1548 = vunpack.c.l.b16 %v1516
    %v1549 = vunpack.c.l.b16 %v1517
    %v1550 = vunpack.c.l.b16 %v1518
    %v1551 = vunpack.c.l.b16 %v1519
    %v1552 = vunpack.c.l.b16 %v1520
    %v1553 = vpack.c.b16 %v1538, %v1537
    %v1554 = vpack.c.b16 %v1540, %v1539
    %v1555 = vpack.c.b16 %v1542, %v1541
    %v1556 = vpack.c.b16 %v1544, %v1543
    %v1557 = vpack.c.b16 %v1546, %v1545
    %v1558 = vpack.c.b16 %v1548, %v1547
    %v1559 = vpack.c.b16 %v1550, %v1549
    %v1560 = vpack.c.b16 %v1552, %v1551
    %1569 = vmatprep.subr.bf16.mxu0 0
    %1570 = vmatpush1.bf16.msra.mxu0 %v1560
    %1571 = vmatprep.subr.bf16.mxu0 0
    %1572 = vmatpush1.bf16.msra.mxu0 %v1559
    %1573 = vmatprep.subr.bf16.mxu0 0
    %1574 = vmatpush1.bf16.msra.mxu0 %v1558
    %1575 = vmatprep.subr.bf16.mxu0 0
    %1576 = vmatpush1.bf16.msra.mxu0 %v1557
    %1577 = vmatprep.subr.bf16.mxu0 0
    %1578 = vmatpush1.bf16.msra.mxu0 %v1556
    %1579 = vmatprep.subr.bf16.mxu0 0
    %1580 = vmatpush1.bf16.msra.mxu0 %v1555
    %1581 = vmatprep.subr.bf16.mxu0 0
    %1582 = vmatpush1.bf16.msra.mxu0 %v1554
    %1583 = vmatprep.subr.bf16.mxu0 0
    %1584 = vmatpush1.bf16.msra.mxu0 %v1553
    %1585 = vmatprep.subr.bf16.mxu0 0
    %1586 = vmatpush2.bf16.msra.mxu0 0
    %1587 = vmatprep.subr.bf16.mxu0 0
    %1588 = vmatpush2.bf16.msra.mxu0 0
    %1589 = vmatprep.subr.bf16.mxu0 0
    %1590 = vmatpush2.bf16.msra.mxu0 0
    %1591 = vmatprep.subr.bf16.mxu0 0
    %1592 = vmatpush2.bf16.msra.mxu0 0
    %1593 = vmatprep.subr.bf16.mxu0 0
    %1594 = vmatpush2.bf16.msra.mxu0 0
    %1595 = vmatprep.subr.bf16.mxu0 0
    %1596 = vmatpush2.bf16.msra.mxu0 0
    %1597 = vmatprep.subr.bf16.mxu0 0
    %1598 = vmatpush2.bf16.msra.mxu0 0
    %1599 = vmatprep.subr.bf16.mxu0 0
    %1600 = vmatpush2.bf16.msra.mxu0 0
    %1601 = vmatprep.mubr.bf16.mxu0 0
    %1602 = vmatmul.mubr.bf16.gmra.mxu0 %v1388
    %v1603 = vpop.f32.mrf.mxu0
    %v1604 = vadd.f32 0.0, %v1603
    %v1605 = vpop.f32.mrf.mxu0
    %v1606 = vpop.f32.mrf.mxu0
    %v1607 = vadd.f32 0.0, %v1606
    %v1608 = vpop.f32.mrf.mxu0
    %1609 = vmatprep.mubr.bf16.mxu0 0
    %1610 = vmatmul.mubr.bf16.gmra.mxu0 %v1389
    %v1611 = vpop.f32.mrf.mxu0
    %v1612 = vadd.f32 0.0, %v1611
    %v1613 = vpop.f32.mrf.mxu0
    %v1614 = vpop.f32.mrf.mxu0
    %v1615 = vadd.f32 0.0, %v1614
    %v1616 = vpop.f32.mrf.mxu0
    %1617 = vmatprep.mubr.bf16.mxu0 0
    %1618 = vmatmul.mubr.bf16.gmra.mxu0 %v1390
    %v1619 = vpop.f32.mrf.mxu0
    %v1620 = vadd.f32 0.0, %v1619
    %v1621 = vpop.f32.mrf.mxu0
    %v1622 = vpop.f32.mrf.mxu0
    %v1623 = vpop.f32.mrf.mxu0
    %1624 = vdwg.mxu0
    %v1625 = vpack.c.bf16 %v1494, %v1491
    %v1626 = vpack.c.bf16 %v1499, %v1499
    %s1627 = scalar_lea.vmem [#allocation8], 256
    %v1628 = vld [vmem:[%s1627] sm:$0xf]
    %v1629 = vld [vmem:[%s1627 + $0x4] sm:$0xf]
    %v1630 = vld [vmem:[%s1627 + $0x8] sm:$0xf]
    %v1631 = vld [vmem:[%s1627 + $0xc] sm:$0xf]
    %v1632 = vld [vmem:[%s1627 + $0x10] sm:$0xf]
    %v1633 = vld [vmem:[%s1627 + $0x14] sm:$0xf]
    %v1634 = vld [vmem:[%s1627 + $0x18] sm:$0xf]
    %v1635 = vld [vmem:[%s1627 + $0x1c] sm:$0xf]
    %v1636 = vld [vmem:[%s1627 + $0x20] sm:$0xf]
    %v1637 = vld [vmem:[%s1627 + $0x24] sm:$0xf]
    %v1638 = vld [vmem:[%s1627 + $0x28] sm:$0xf]
    %v1639 = vld [vmem:[%s1627 + $0x2c] sm:$0xf]
    %v1640 = vld [vmem:[%s1627 + $0x30] sm:$0xf]
    %v1641 = vld [vmem:[%s1627 + $0x34] sm:$0xf]
    %v1642 = vld [vmem:[%s1627 + $0x38] sm:$0xf]
    %v1643 = vld [vmem:[%s1627 + $0x3c] sm:$0xf]
    %v1660 = vunpack.c.l.b16 %v1628
    %v1661 = vunpack.c.l.b16 %v1629
    %v1662 = vunpack.c.l.b16 %v1630
    %v1663 = vunpack.c.l.b16 %v1631
    %v1664 = vunpack.c.l.b16 %v1632
    %v1665 = vunpack.c.l.b16 %v1633
    %v1666 = vunpack.c.l.b16 %v1634
    %v1667 = vunpack.c.l.b16 %v1635
    %v1668 = vunpack.c.l.b16 %v1636
    %v1669 = vunpack.c.l.b16 %v1637
    %v1670 = vunpack.c.l.b16 %v1638
    %v1671 = vunpack.c.l.b16 %v1639
    %v1672 = vunpack.c.l.b16 %v1640
    %v1673 = vunpack.c.l.b16 %v1641
    %v1674 = vunpack.c.l.b16 %v1642
    %v1675 = vunpack.c.l.b16 %v1643
    %v1676 = vpack.c.b16 %v1661, %v1660
    %v1677 = vpack.c.b16 %v1663, %v1662
    %v1678 = vpack.c.b16 %v1665, %v1664
    %v1679 = vpack.c.b16 %v1667, %v1666
    %v1680 = vpack.c.b16 %v1669, %v1668
    %v1681 = vpack.c.b16 %v1671, %v1670
    %v1682 = vpack.c.b16 %v1673, %v1672
    %v1683 = vpack.c.b16 %v1675, %v1674
    %1692 = vmatprep.subr.bf16.mxu0 0
    %1693 = vmatpush1.bf16.msra.mxu0 %v1683
    %1694 = vmatprep.subr.bf16.mxu0 0
    %1695 = vmatpush1.bf16.msra.mxu0 %v1682
    %1696 = vmatprep.subr.bf16.mxu0 0
    %1697 = vmatpush1.bf16.msra.mxu0 %v1681
    %1698 = vmatprep.subr.bf16.mxu0 0
    %1699 = vmatpush1.bf16.msra.mxu0 %v1680
    %1700 = vmatprep.subr.bf16.mxu0 0
    %1701 = vmatpush1.bf16.msra.mxu0 %v1679
    %1702 = vmatprep.subr.bf16.mxu0 0
    %1703 = vmatpush1.bf16.msra.mxu0 %v1678
    %1704 = vmatprep.subr.bf16.mxu0 0
    %1705 = vmatpush1.bf16.msra.mxu0 %v1677
    %1706 = vmatprep.subr.bf16.mxu0 0
    %1707 = vmatpush1.bf16.msra.mxu0 %v1676
    %1708 = vmatprep.subr.bf16.mxu0 0
    %1709 = vmatpush2.bf16.msra.mxu0 0
    %1710 = vmatprep.subr.bf16.mxu0 0
    %1711 = vmatpush2.bf16.msra.mxu0 0
    %1712 = vmatprep.subr.bf16.mxu0 0
    %1713 = vmatpush2.bf16.msra.mxu0 0
    %1714 = vmatprep.subr.bf16.mxu0 0
    %1715 = vmatpush2.bf16.msra.mxu0 0
    %1716 = vmatprep.subr.bf16.mxu0 0
    %1717 = vmatpush2.bf16.msra.mxu0 0
    %1718 = vmatprep.subr.bf16.mxu0 0
    %1719 = vmatpush2.bf16.msra.mxu0 0
    %1720 = vmatprep.subr.bf16.mxu0 0
    %1721 = vmatpush2.bf16.msra.mxu0 0
    %1722 = vmatprep.subr.bf16.mxu0 0
    %1723 = vmatpush2.bf16.msra.mxu0 0
    %1724 = vmatprep.mubr.bf16.mxu0 0
    %1725 = vmatmul.mubr.bf16.gmra.mxu0 %v1388
    %v1726 = vpop.f32.mrf.mxu0
    %v1727 = vadd.f32 0.0, %v1726
    %v1728 = vpop.f32.mrf.mxu0
    %v1729 = vpop.f32.mrf.mxu0
    %v1730 = vadd.f32 0.0, %v1729
    %v1731 = vpop.f32.mrf.mxu0
    %1732 = vmatprep.mubr.bf16.mxu0 0
    %1733 = vmatmul.mubr.bf16.gmra.mxu0 %v1389
    %v1734 = vpop.f32.mrf.mxu0
    %v1735 = vadd.f32 0.0, %v1734
    %v1736 = vpop.f32.mrf.mxu0
    %v1737 = vpop.f32.mrf.mxu0
    %v1738 = vadd.f32 0.0, %v1737
    %v1739 = vpop.f32.mrf.mxu0
    %1740 = vmatprep.mubr.bf16.mxu0 0
    %1741 = vmatmul.mubr.bf16.gmra.mxu0 %v1390
    %v1742 = vpop.f32.mrf.mxu0
    %v1743 = vadd.f32 0.0, %v1742
    %v1744 = vpop.f32.mrf.mxu0
    %v1745 = vpop.f32.mrf.mxu0
    %v1746 = vpop.f32.mrf.mxu0
    %1747 = vdwg.mxu0
    %v1749 = vsel %vm504, %v1626, 0
    %1751 = vmatprep.subr.bf16.mxu0 0
    %1752 = vmatpush1.bf16.msra.mxu0 0
    %1753 = vmatprep.subr.bf16.mxu0 0
    %1754 = vmatpush1.bf16.msra.mxu0 0
    %1755 = vmatprep.subr.bf16.mxu0 0
    %1756 = vmatpush1.bf16.msra.mxu0 0
    %1757 = vmatprep.subr.bf16.mxu0 0
    %1758 = vmatpush1.bf16.msra.mxu0 0
    %1759 = vmatprep.subr.bf16.mxu0 0
    %1760 = vmatpush1.bf16.msra.mxu0 0
    %1761 = vmatprep.subr.bf16.mxu0 0
    %1762 = vmatpush1.bf16.msra.mxu0 0
    %1763 = vmatprep.subr.bf16.mxu0 0
    %1764 = vmatpush1.bf16.msra.mxu0 %v1749
    %1765 = vmatprep.subr.bf16.mxu0 0
    %1766 = vmatpush1.bf16.msra.mxu0 %v1625
    %1767 = vmatprep.subr.bf16.mxu0 0
    %1768 = vmatpush2.bf16.msra.mxu0 0
    %1769 = vmatprep.subr.bf16.mxu0 0
    %1770 = vmatpush2.bf16.msra.mxu0 0
    %1771 = vmatprep.subr.bf16.mxu0 0
    %1772 = vmatpush2.bf16.msra.mxu0 0
    %1773 = vmatprep.subr.bf16.mxu0 0
    %1774 = vmatpush2.bf16.msra.mxu0 0
    %1775 = vmatprep.subr.bf16.mxu0 0
    %1776 = vmatpush2.bf16.msra.mxu0 0
    %1777 = vmatprep.subr.bf16.mxu0 0
    %1778 = vmatpush2.bf16.msra.mxu0 0
    %1779 = vmatprep.subr.bf16.mxu0 0
    %1780 = vmatpush2.bf16.msra.mxu0 0
    %1781 = vmatprep.subr.bf16.mxu0 0
    %1782 = vmatpush2.bf16.msra.mxu0 0
    %1783 = vmatprep.mubr.bf16.mxu0 0
    %1784 = vmatmul.mubr.bf16.gmra.mxu0 %v496
    %v1785 = vpop.f32.mrf.mxu0
    %v1786 = vadd.f32 %v1727, %v1785
    %v1787 = vpop.f32.mrf.mxu0
    %v1788 = vpop.f32.mrf.mxu0
    %v1789 = vadd.f32 %v1730, %v1788
    %v1790 = vpop.f32.mrf.mxu0
    %1791 = vmatprep.mubr.bf16.mxu0 0
    %1792 = vmatmul.mubr.bf16.gmra.mxu0 %v499
    %v1793 = vpop.f32.mrf.mxu0
    %v1794 = vadd.f32 %v1735, %v1793
    %v1795 = vpop.f32.mrf.mxu0
    %v1796 = vpop.f32.mrf.mxu0
    %v1797 = vadd.f32 %v1738, %v1796
    %v1798 = vpop.f32.mrf.mxu0
    %1799 = vmatprep.mubr.bf16.mxu0 0
    %1800 = vmatmul.mubr.bf16.gmra.mxu0 %v502
    %v1801 = vpop.f32.mrf.mxu0
    %v1802 = vadd.f32 %v1743, %v1801
    %v1803 = vpop.f32.mrf.mxu0
    %v1804 = vpop.f32.mrf.mxu0
    %v1805 = vpop.f32.mrf.mxu0
    %1806 = vdwg.mxu0
    %v1807 = vld [vmem:[%s6 + $0x4] sm:$0x1]
    %v1808 = vlaneseq
    %v1809 = vshrl.u32 %v1808, 7
    %v1810 = vsub.s32 0, %v1809
    %v1811 = vrot.slane %v1807, %v1810
    %v1812 = vadd.f32 %v1786, %v1811
    %v1813 = vadd.f32 %v1789, %v1811
    %v1814 = vadd.f32 %v1794, %v1811
    %v1815 = vadd.f32 %v1797, %v1811
    %v1816 = vadd.f32 %v1802, %v1811
    %v1817 = vpack.c.bf16 %v1607, %v1604
    %v1818 = vpack.c.bf16 %v1615, %v1612
    %v1819 = vpack.c.bf16 %v1620, %v1620
    %s1820 = scalar_lea.vmem [#allocation8], 320
    %v1821 = vld [vmem:[%s1820] sm:$0xf]
    %v1822 = vld [vmem:[%s1820 + $0x4] sm:$0xf]
    %v1823 = vld [vmem:[%s1820 + $0x8] sm:$0xf]
    %v1824 = vld [vmem:[%s1820 + $0xc] sm:$0xf]
    %v1825 = vld [vmem:[%s1820 + $0x10] sm:$0xf]
    %v1826 = vld [vmem:[%s1820 + $0x14] sm:$0xf]
    %v1827 = vld [vmem:[%s1820 + $0x18] sm:$0xf]
    %v1828 = vld [vmem:[%s1820 + $0x1c] sm:$0xf]
    %v1829 = vld [vmem:[%s1820 + $0x20] sm:$0xf]
    %v1830 = vld [vmem:[%s1820 + $0x24] sm:$0xf]
    %v1831 = vld [vmem:[%s1820 + $0x28] sm:$0xf]
    %v1832 = vld [vmem:[%s1820 + $0x2c] sm:$0xf]
    %v1833 = vld [vmem:[%s1820 + $0x30] sm:$0xf]
    %v1834 = vld [vmem:[%s1820 + $0x34] sm:$0xf]
    %v1835 = vld [vmem:[%s1820 + $0x38] sm:$0xf]
    %v1836 = vld [vmem:[%s1820 + $0x3c] sm:$0xf]
    %v1853 = vunpack.c.l.b16 %v1821
    %v1854 = vunpack.c.l.b16 %v1822
    %v1855 = vunpack.c.l.b16 %v1823
    %v1856 = vunpack.c.l.b16 %v1824
    %v1857 = vunpack.c.l.b16 %v1825
    %v1858 = vunpack.c.l.b16 %v1826
    %v1859 = vunpack.c.l.b16 %v1827
    %v1860 = vunpack.c.l.b16 %v1828
    %v1861 = vunpack.c.l.b16 %v1829
    %v1862 = vunpack.c.l.b16 %v1830
    %v1863 = vunpack.c.l.b16 %v1831
    %v1864 = vunpack.c.l.b16 %v1832
    %v1865 = vunpack.c.l.b16 %v1833
    %v1866 = vunpack.c.l.b16 %v1834
    %v1867 = vunpack.c.l.b16 %v1835
    %v1868 = vunpack.c.l.b16 %v1836
    %v1869 = vpack.c.b16 %v1854, %v1853
    %v1870 = vpack.c.b16 %v1856, %v1855
    %v1871 = vpack.c.b16 %v1858, %v1857
    %v1872 = vpack.c.b16 %v1860, %v1859
    %v1873 = vpack.c.b16 %v1862, %v1861
    %v1874 = vpack.c.b16 %v1864, %v1863
    %v1875 = vpack.c.b16 %v1866, %v1865
    %v1876 = vpack.c.b16 %v1868, %v1867
    %1885 = vmatprep.subr.bf16.mxu0 0
    %1886 = vmatpush1.bf16.msra.mxu0 %v1876
    %1887 = vmatprep.subr.bf16.mxu0 0
    %1888 = vmatpush1.bf16.msra.mxu0 %v1875
    %1889 = vmatprep.subr.bf16.mxu0 0
    %1890 = vmatpush1.bf16.msra.mxu0 %v1874
    %1891 = vmatprep.subr.bf16.mxu0 0
    %1892 = vmatpush1.bf16.msra.mxu0 %v1873
    %1893 = vmatprep.subr.bf16.mxu0 0
    %1894 = vmatpush1.bf16.msra.mxu0 %v1872
    %1895 = vmatprep.subr.bf16.mxu0 0
    %1896 = vmatpush1.bf16.msra.mxu0 %v1871
    %1897 = vmatprep.subr.bf16.mxu0 0
    %1898 = vmatpush1.bf16.msra.mxu0 %v1870
    %1899 = vmatprep.subr.bf16.mxu0 0
    %1900 = vmatpush1.bf16.msra.mxu0 %v1869
    %1901 = vmatprep.subr.bf16.mxu0 0
    %1902 = vmatpush2.bf16.msra.mxu0 0
    %1903 = vmatprep.subr.bf16.mxu0 0
    %1904 = vmatpush2.bf16.msra.mxu0 0
    %1905 = vmatprep.subr.bf16.mxu0 0
    %1906 = vmatpush2.bf16.msra.mxu0 0
    %1907 = vmatprep.subr.bf16.mxu0 0
    %1908 = vmatpush2.bf16.msra.mxu0 0
    %1909 = vmatprep.subr.bf16.mxu0 0
    %1910 = vmatpush2.bf16.msra.mxu0 0
    %1911 = vmatprep.subr.bf16.mxu0 0
    %1912 = vmatpush2.bf16.msra.mxu0 0
    %1913 = vmatprep.subr.bf16.mxu0 0
    %1914 = vmatpush2.bf16.msra.mxu0 0
    %1915 = vmatprep.subr.bf16.mxu0 0
    %1916 = vmatpush2.bf16.msra.mxu0 0
    %1917 = vmatprep.mubr.bf16.mxu0 0
    %1918 = vmatmul.mubr.bf16.gmra.mxu0 %v1386
    %v1919 = vpop.f32.mrf.mxu0
    %v1920 = vadd.f32 0.0, %v1919
    %v1921 = vpop.f32.mrf.mxu0
    %v1922 = vpop.f32.mrf.mxu0
    %v1923 = vadd.f32 0.0, %v1922
    %v1924 = vpop.f32.mrf.mxu0
    %1925 = vmatprep.mubr.bf16.mxu0 0
    %1926 = vmatmul.mubr.bf16.gmra.mxu0 %v1387
    %v1927 = vpop.f32.mrf.mxu0
    %v1928 = vadd.f32 0.0, %v1927
    %v1929 = vpop.f32.mrf.mxu0
    %v1930 = vpop.f32.mrf.mxu0
    %v1931 = vpop.f32.mrf.mxu0
    %1932 = vdwg.mxu0
    %v1934 = vsel %vm504, %v1819, 0
    %1936 = vmatprep.subr.bf16.mxu0 0
    %1937 = vmatpush1.bf16.msra.mxu0 0
    %1938 = vmatprep.subr.bf16.mxu0 0
    %1939 = vmatpush1.bf16.msra.mxu0 0
    %1940 = vmatprep.subr.bf16.mxu0 0
    %1941 = vmatpush1.bf16.msra.mxu0 0
    %1942 = vmatprep.subr.bf16.mxu0 0
    %1943 = vmatpush1.bf16.msra.mxu0 0
    %1944 = vmatprep.subr.bf16.mxu0 0
    %1945 = vmatpush1.bf16.msra.mxu0 0
    %1946 = vmatprep.subr.bf16.mxu0 0
    %1947 = vmatpush1.bf16.msra.mxu0 %v1934
    %1948 = vmatprep.subr.bf16.mxu0 0
    %1949 = vmatpush1.bf16.msra.mxu0 %v1818
    %1950 = vmatprep.subr.bf16.mxu0 0
    %1951 = vmatpush1.bf16.msra.mxu0 %v1817
    %1952 = vmatprep.subr.bf16.mxu0 0
    %1953 = vmatpush2.bf16.msra.mxu0 0
    %1954 = vmatprep.subr.bf16.mxu0 0
    %1955 = vmatpush2.bf16.msra.mxu0 0
    %1956 = vmatprep.subr.bf16.mxu0 0
    %1957 = vmatpush2.bf16.msra.mxu0 0
    %1958 = vmatprep.subr.bf16.mxu0 0
    %1959 = vmatpush2.bf16.msra.mxu0 0
    %1960 = vmatprep.subr.bf16.mxu0 0
    %1961 = vmatpush2.bf16.msra.mxu0 0
    %1962 = vmatprep.subr.bf16.mxu0 0
    %1963 = vmatpush2.bf16.msra.mxu0 0
    %1964 = vmatprep.subr.bf16.mxu0 0
    %1965 = vmatpush2.bf16.msra.mxu0 0
    %1966 = vmatprep.subr.bf16.mxu0 0
    %1967 = vmatpush2.bf16.msra.mxu0 0
    %1968 = vmatprep.mubr.bf16.mxu0 0
    %1969 = vmatmul.mubr.bf16.gmra.mxu0 %v700
    %v1970 = vpop.f32.mrf.mxu0
    %v1971 = vadd.f32 %v1920, %v1970
    %v1972 = vpop.f32.mrf.mxu0
    %v1973 = vpop.f32.mrf.mxu0
    %v1974 = vadd.f32 %v1923, %v1973
    %v1975 = vpop.f32.mrf.mxu0
    %1976 = vmatprep.mubr.bf16.mxu0 0
    %1977 = vmatmul.mubr.bf16.gmra.mxu0 %v703
    %v1978 = vpop.f32.mrf.mxu0
    %v1979 = vadd.f32 %v1928, %v1978
    %v1980 = vpop.f32.mrf.mxu0
    %v1981 = vpop.f32.mrf.mxu0
    %v1982 = vpop.f32.mrf.mxu0
    %1983 = vdwg.mxu0
    %v1984 = vld [vmem:[%s6 + $0x5] sm:$0x1]
    %v1985 = vlaneseq
    %v1986 = vshrl.u32 %v1985, 7
    %v1987 = vsub.s32 0, %v1986
    %v1988 = vrot.slane %v1984, %v1987
    %v1989 = vadd.f32 %v1971, %v1988
    %v1990 = vadd.f32 %v1974, %v1988
    %v1991 = vadd.f32 %v1979, %v1988
    %v1992 = vld [vmem:[#allocation10] sm:$0xf]
    %v1993 = vld [vmem:[#allocation10 + $0x4] sm:$0xf]
    %v1994 = vld [vmem:[#allocation10 + $0x8] sm:$0xf]
    %v1995 = vld [vmem:[#allocation10 + $0xc] sm:$0xf]
    %v1996 = vld [vmem:[#allocation10 + $0x10] sm:$0xf]
    %v1997 = vld [vmem:[#allocation10 + $0x14] sm:$0xf]
    %v1998 = vld [vmem:[#allocation10 + $0x18] sm:$0xf]
    %v1999 = vld [vmem:[#allocation10 + $0x1c] sm:$0xf]
    %v2000 = vld [vmem:[#allocation10 + $0x20] sm:$0xf]
    %v2001 = vld [vmem:[#allocation10 + $0x24] sm:$0xf]
    %v2002 = vld [vmem:[#allocation10 + $0x28] sm:$0xf]
    %v2003 = vld [vmem:[#allocation10 + $0x2c] sm:$0xf]
    %v2004 = vld [vmem:[#allocation10 + $0x30] sm:$0xf]
    %v2005 = vld [vmem:[#allocation10 + $0x34] sm:$0xf]
    %v2006 = vld [vmem:[#allocation10 + $0x38] sm:$0xf]
    %v2007 = vld [vmem:[#allocation10 + $0x3c] sm:$0xf]
    %v2008 = vld [vmem:[%s8] sm:$0x1]
    %v2009 = vpack.c.bf16 %v1990, %v1989
    %v2010 = vpack.c.bf16 %v1991, %v1991
    %v2012 = vlaneseq
    %v2013 = vshrl.u32 %v2012, 7
    %v2014 = vsub.s32 0, %v2013
    %v2015 = vrot.slane %v2008, %v2014
    %v2033 = vunpack.c.l.b16 %v1992
    %v2034 = vunpack.c.l.b16 %v1993
    %v2035 = vunpack.c.l.b16 %v1994
    %v2036 = vunpack.c.l.b16 %v1995
    %v2037 = vunpack.c.l.b16 %v1996
    %v2038 = vunpack.c.l.b16 %v1997
    %v2039 = vunpack.c.l.b16 %v1998
    %v2040 = vunpack.c.l.b16 %v1999
    %v2041 = vunpack.c.l.b16 %v2000
    %v2042 = vunpack.c.l.b16 %v2001
    %v2043 = vunpack.c.l.b16 %v2002
    %v2044 = vunpack.c.l.b16 %v2003
    %v2045 = vunpack.c.l.b16 %v2004
    %v2046 = vunpack.c.l.b16 %v2005
    %v2047 = vunpack.c.l.b16 %v2006
    %v2048 = vunpack.c.l.b16 %v2007
    %v2049 = vpack.c.b16 %v2034, %v2033
    %v2050 = vpack.c.b16 %v2036, %v2035
    %v2051 = vpack.c.b16 %v2038, %v2037
    %v2052 = vpack.c.b16 %v2040, %v2039
    %v2053 = vpack.c.b16 %v2042, %v2041
    %v2054 = vpack.c.b16 %v2044, %v2043
    %v2055 = vpack.c.b16 %v2046, %v2045
    %v2056 = vpack.c.b16 %v2048, %v2047
    %2065 = vmatprep.subr.bf16.mxu0 0
    %2066 = vmatpush1.bf16.msra.mxu0 %v2056
    %2067 = vmatprep.subr.bf16.mxu0 0
    %2068 = vmatpush1.bf16.msra.mxu0 %v2055
    %2069 = vmatprep.subr.bf16.mxu0 0
    %2070 = vmatpush1.bf16.msra.mxu0 %v2054
    %2071 = vmatprep.subr.bf16.mxu0 0
    %2072 = vmatpush1.bf16.msra.mxu0 %v2053
    %2073 = vmatprep.subr.bf16.mxu0 0
    %2074 = vmatpush1.bf16.msra.mxu0 %v2052
    %2075 = vmatprep.subr.bf16.mxu0 0
    %2076 = vmatpush1.bf16.msra.mxu0 %v2051
    %2077 = vmatprep.subr.bf16.mxu0 0
    %2078 = vmatpush1.bf16.msra.mxu0 %v2050
    %2079 = vmatprep.subr.bf16.mxu0 0
    %2080 = vmatpush1.bf16.msra.mxu0 %v2049
    %2081 = vmatprep.subr.bf16.mxu0 0
    %2082 = vmatpush2.bf16.msra.mxu0 0
    %2083 = vmatprep.subr.bf16.mxu0 0
    %2084 = vmatpush2.bf16.msra.mxu0 0
    %2085 = vmatprep.subr.bf16.mxu0 0
    %2086 = vmatpush2.bf16.msra.mxu0 0
    %2087 = vmatprep.subr.bf16.mxu0 0
    %2088 = vmatpush2.bf16.msra.mxu0 0
    %2089 = vmatprep.subr.bf16.mxu0 0
    %2090 = vmatpush2.bf16.msra.mxu0 0
    %2091 = vmatprep.subr.bf16.mxu0 0
    %2092 = vmatpush2.bf16.msra.mxu0 0
    %2093 = vmatprep.subr.bf16.mxu0 0
    %2094 = vmatpush2.bf16.msra.mxu0 0
    %2095 = vmatprep.subr.bf16.mxu0 0
    %2096 = vmatpush2.bf16.msra.mxu0 0
    %2097 = vmatprep.mubr.bf16.mxu0 0
    %2098 = vmatmul.mubr.bf16.gmra.mxu0 %v2009
    %v2099 = vpop.f32.mrf.mxu0
    %v2100 = vadd.f32 %v2015, %v2099
    %v2101 = vpop.f32.mrf.mxu0
    %v2102 = vpop.f32.mrf.mxu0
    %v2103 = vadd.f32 %v2015, %v2102
    %v2104 = vpop.f32.mrf.mxu0
    %2105 = vmatprep.mubr.bf16.mxu0 0
    %2106 = vmatmul.mubr.bf16.gmra.mxu0 %v2010
    %v2107 = vpop.f32.mrf.mxu0
    %v2108 = vadd.f32 %v2015, %v2107
    %v2109 = vpop.f32.mrf.mxu0
    %v2110 = vpop.f32.mrf.mxu0
    %v2111 = vpop.f32.mrf.mxu0
    %2112 = vdwg.mxu0
    %2113 = vst [vmem:[#allocation11] sm:$0xff] %v2100
    %2114 = vst [vmem:[#allocation11 + $0x8] sm:$0xff] %v2103
    %2115 = vst [vmem:[#allocation11 + $0x10] sm:$0xff] %v2108
    %v2116 = vpack.c.bf16 %v1813, %v1812
    %v2117 = vpack.c.bf16 %v1815, %v1814
    %v2118 = vpack.c.bf16 %v1816, %v1816
    %2119 = vmatprep.subr.bf16.mxu0 0
    %2120 = vmatpush1.bf16.msra.mxu0 %v2056
    %2121 = vmatprep.subr.bf16.mxu0 0
    %2122 = vmatpush1.bf16.msra.mxu0 %v2055
    %2123 = vmatprep.subr.bf16.mxu0 0
    %2124 = vmatpush1.bf16.msra.mxu0 %v2054
    %2125 = vmatprep.subr.bf16.mxu0 0
    %2126 = vmatpush1.bf16.msra.mxu0 %v2053
    %2127 = vmatprep.subr.bf16.mxu0 0
    %2128 = vmatpush1.bf16.msra.mxu0 %v2052
    %2129 = vmatprep.subr.bf16.mxu0 0
    %2130 = vmatpush1.bf16.msra.mxu0 %v2051
    %2131 = vmatprep.subr.bf16.mxu0 0
    %2132 = vmatpush1.bf16.msra.mxu0 %v2050
    %2133 = vmatprep.subr.bf16.mxu0 0
    %2134 = vmatpush1.bf16.msra.mxu0 %v2049
    %2135 = vmatprep.subr.bf16.mxu0 0
    %2136 = vmatpush2.bf16.msra.mxu0 0
    %2137 = vmatprep.subr.bf16.mxu0 0
    %2138 = vmatpush2.bf16.msra.mxu0 0
    %2139 = vmatprep.subr.bf16.mxu0 0
    %2140 = vmatpush2.bf16.msra.mxu0 0
    %2141 = vmatprep.subr.bf16.mxu0 0
    %2142 = vmatpush2.bf16.msra.mxu0 0
    %2143 = vmatprep.subr.bf16.mxu0 0
    %2144 = vmatpush2.bf16.msra.mxu0 0
    %2145 = vmatprep.subr.bf16.mxu0 0
    %2146 = vmatpush2.bf16.msra.mxu0 0
    %2147 = vmatprep.subr.bf16.mxu0 0
    %2148 = vmatpush2.bf16.msra.mxu0 0
    %2149 = vmatprep.subr.bf16.mxu0 0
    %2150 = vmatpush2.bf16.msra.mxu0 0
    %2151 = vmatprep.mubr.bf16.mxu0 0
    %2152 = vmatmul.mubr.bf16.gmra.mxu0 %v2116
    %v2153 = vpop.f32.mrf.mxu0
    %v2154 = vadd.f32 %v2015, %v2153
    %v2155 = vpop.f32.mrf.mxu0
    %v2156 = vpop.f32.mrf.mxu0
    %v2157 = vadd.f32 %v2015, %v2156
    %v2158 = vpop.f32.mrf.mxu0
    %2159 = vmatprep.mubr.bf16.mxu0 0
    %2160 = vmatmul.mubr.bf16.gmra.mxu0 %v2117
    %v2161 = vpop.f32.mrf.mxu0
    %v2162 = vadd.f32 %v2015, %v2161
    %v2163 = vpop.f32.mrf.mxu0
    %v2164 = vpop.f32.mrf.mxu0
    %v2165 = vadd.f32 %v2015, %v2164
    %v2166 = vpop.f32.mrf.mxu0
    %2167 = vmatprep.mubr.bf16.mxu0 0
    %2168 = vmatmul.mubr.bf16.gmra.mxu0 %v2118
    %v2169 = vpop.f32.mrf.mxu0
    %v2170 = vadd.f32 %v2015, %v2169
    %v2171 = vpop.f32.mrf.mxu0
    %v2172 = vpop.f32.mrf.mxu0
    %v2173 = vpop.f32.mrf.mxu0
    %2174 = vdwg.mxu0
    %2175 = vst [vmem:[#allocation12] sm:$0xff] %v2154
    %2176 = vst [vmem:[#allocation12 + $0x8] sm:$0xff] %v2157
    %2177 = vst [vmem:[#allocation12 + $0x10] sm:$0xff] %v2162
    %2178 = vst [vmem:[#allocation12 + $0x18] sm:$0xff] %v2165
    %2179 = vst [vmem:[#allocation12 + $0x20] sm:$0xff] %v2170
    // Predicated region
    $region58: #{tpu_custom_call.1} parent=1 // pred_check
      _
    $region59: #{tpu_custom_call.1} parent=1 // pred_check_branch
      %2181 = sbr.rel (0) target = $region61
    $region60: #{tpu_custom_call.1} parent=1 // pred_region
      %s2183 = ssub.s32 384, 384
      %2184 = vsyncadd [#allocation4], %s2183
      %s2185 = sshll.u32 [#allocation11], 4
      %s2186 = int_to_ptr.vmem [resolvable:$true] %s2185
      %2191 = dma.vmem_to_hbm [thread:$0]  %s2186, 384, %s9, [#allocation4], 128, 128, 8
    $region61: #{tpu_custom_call.1} parent=1 // pred_fallthru
      _
    // Predicated region
    $region62: #{tpu_custom_call.1} parent=1 // pred_check
      _
    $region63: #{tpu_custom_call.1} parent=1 // pred_check_branch
      %2193 = sbr.rel (0) target = $region65
    $region64: #{tpu_custom_call.1} parent=1 // pred_region
      %s2195 = ssub.s32 640, 640
      %2196 = vsyncadd [#allocation13], %s2195
      %s2197 = sshll.u32 [#allocation12], 4
      %s2198 = int_to_ptr.vmem [resolvable:$true] %s2197
      %2203 = dma.vmem_to_hbm [thread:$0]  %s2198, 640, %s10, [#allocation13], 128, 128, 8
    $region65: #{tpu_custom_call.1} parent=1 // pred_fallthru
      _
    // Predicated region
    $region66: #{tpu_custom_call.1} parent=1 // pred_check
      _
    $region67: #{tpu_custom_call.1} parent=1 // pred_check_branch
      %2205 = sbr.rel (0) target = $region69
    $region68: #{tpu_custom_call.1} parent=1 // pred_region
      %2206 = dma.done [#allocation4], 384
    $region69: #{tpu_custom_call.1} parent=1 // pred_fallthru
      _
    // Predicated region
    $region70: #{tpu_custom_call.1} parent=1 // pred_check
      _
    $region71: #{tpu_custom_call.1} parent=1 // pred_check_branch
      %2208 = sbr.rel (0) target = $region73
    $region72: #{tpu_custom_call.1} parent=1 // pred_region
      %2209 = dma.done [#allocation13], 640
    $region73: #{tpu_custom_call.1} parent=1 // pred_fallthru
      _
    %2210 = vsyncpa [#allocation3], 1
    %2211 = vsyncpa [#allocation6], 1
    %2212 = vsyncpa [#allocation9], 1
    %2213 = vsyncpa [#allocation4], 1
    %2214 = vsyncpa [#allocation13], 1

</llo_original>
